<compile_context>
chip_gen: v6e
topology: v6e:2x2x1
jax: 0.10.0
libtpu: 0.0.40
codegen_flags: <defaults>
</compile_context>

<pallas_src>
import functools

import jax
import jax.numpy as jnp
from jax import lax
from jax.experimental import pallas as pl
from jax.experimental.pallas import tpu as pltpu

LANES = 128
SUBLANES = 8


# ----------------------------- Pallas kernel ------------------------------ #

def _tf_kernel(idx_ref, utab_ref, ctab_ref, o_ref, *, apply_sigmoid: bool):
    """One batch tile.

    idx_ref : (3, tb) int32 -- rows: [user, item, itemage + n_items].
    utab_ref: (D, nu)  f32  -- transposed user table, rows padded to mult of 8.
    ctab_ref: (D, nc)  f32  -- transposed [item; time] table (concatenated
                               along rows), rows padded to mult of 8.
    o_ref   : (1, tb)  f32  -- lane-dense scores.
    """
    tb = o_ref.shape[-1]
    nu = utab_ref.shape[-1]
    nc = ctab_ref.shape[-1]
    nmax = max(nu, nc)

    idx = idx_ref[...]                       # (3, tb) int32
    uidx = idx[0:1, :]                       # (1, tb)
    iidx = idx[1:2, :]
    tidx = idx[2:3, :]                       # already offset by n_items (wrapper)

    # One shared iota per grid step; per-table slices land on sublane-tile
    # boundaries because nu/nc are multiples of 8.
    rows = lax.broadcasted_iota(jnp.int32, (nmax, tb), 0)
    rows_u = rows if nu == nmax else rows[:nu]
    rows_c = rows if nc == nmax else rows[:nc]

    onehot_u = (rows_u == uidx).astype(jnp.float32)                      # (nu, tb)
    # Stacked one-hot: two disjoint 1s per column (item row, n_items+time row),
    # so the single matmul below accumulates item_e + time_e on the MXU.
    onehot_c = jnp.logical_or(rows_c == iidx, rows_c == tidx).astype(jnp.float32)

    u = jnp.dot(utab_ref[...], onehot_u,
                preferred_element_type=jnp.float32,
                precision=lax.Precision.HIGHEST)                         # (D, tb)
    it = jnp.dot(ctab_ref[...], onehot_c,
                 preferred_element_type=jnp.float32,
                 precision=lax.Precision.HIGHEST)                        # (D, tb)

    s = jnp.sum(u * it, axis=0, keepdims=True)                           # (1, tb)
    if apply_sigmoid:                                                    # loss_type == 'NLL'
        s = jax.nn.sigmoid(s)
    o_ref[...] = s


# ------------------------------- wrapper ----------------------------------- #

def _pick_batch_tile(batch, max_tb, nmax_rows, d, vmem_limit):
    """Largest lane-multiple batch tile, capped by max_tb and a conservative
    per-lane VMEM estimate (double-buffered idx/out blocks + iota + one-hot +
    gathered temporaries, all f32/int32)."""
    per_lane_bytes = 2 * 4 * (3 + 1) + 4 * (3 * nmax_rows + 2 * d) + 64
    vmem_cap = max(LANES, ((vmem_limit // 2) // per_lane_bytes) // LANES * LANES)
    b_up = pl.cdiv(batch, LANES) * LANES
    return max(LANES, min(b_up, max_tb, vmem_cap))


def tf_forward_pallas(user, item, itemage, utab_t, ctab_t, *, n_items,
                      apply_sigmoid=False, max_tb=8192,
                      vmem_limit=32 * 1024 * 1024):
    """Fused TF forward.

    user/item/itemage: (B,) integer indices.
    utab_t: (D, nu) f32 transposed user table (rows padded to mult of 8).
    ctab_t: (D, nc) f32 transposed concat([item_table, time_table]) (padded).
    Returns (B,) f32 scores.
    """
    B = int(user.shape[0])
    D = utab_t.shape[0]
    nmax = max(utab_t.shape[1], ctab_t.shape[1])

    # Single stacked index array; time indices pre-offset into the combined
    # (item;time) table so the kernel does no per-step index arithmetic.
    idx = jnp.stack([user.astype(jnp.int32),
                     item.astype(jnp.int32),
                     itemage.astype(jnp.int32) + jnp.int32(n_items)], axis=0)

    tb = _pick_batch_tile(B, max_tb, nmax, D, vmem_limit)
    b_pad = pl.cdiv(B, tb) * tb
    if b_pad != B:
        # Pad with index 0 (valid rows); padded lanes are sliced off below.
        idx = jnp.pad(idx, ((0, 0), (0, b_pad - B)))
    grid = b_pad // tb

    kernel = functools.partial(_tf_kernel, apply_sigmoid=apply_sigmoid)
    out = pl.pallas_call(
        kernel,
        out_shape=jax.ShapeDtypeStruct((1, b_pad), jnp.float32),
        grid_spec=pltpu.PrefetchScalarGridSpec(
            num_scalar_prefetch=0,
            grid=(grid,),
            in_specs=[
                pl.BlockSpec((3, tb), lambda b: (0, b)),          # stacked indices
                pl.BlockSpec(utab_t.shape, lambda b: (0, 0)),     # resident table
                pl.BlockSpec(ctab_t.shape, lambda b: (0, 0)),     # resident table
            ],
            out_specs=pl.BlockSpec((1, tb), lambda b: (0, b)),    # lane-dense out
        ),
        compiler_params=pltpu.CompilerParams(
            # NOTE: CORE_PARALLEL would be needed to split across v7x's two
            # TensorCores, but it is not portable across generations; grid is 1
            # for typical batches here anyway.
            dimension_semantics=("parallel",),
            vmem_limit_bytes=vmem_limit,
        ),
    )(idx, utab_t, ctab_t)
    return out[0, :B]                                             # (B,)


# ------------------------------ TF module --------------------------------- #

def _xavier_normal(key, num_rows, dim):
    # matches torch.nn.init.xavier_normal_ on a (num_rows, dim) weight:
    # std = sqrt(2 / (fan_in + fan_out))
    std = (2.0 / (num_rows + dim)) ** 0.5
    return std * jax.random.normal(key, (num_rows, dim), dtype=jnp.float32)


def _pad_rows_and_transpose(table, multiple=SUBLANES):
    # (n, D) -> (D, n_pad): row dim zero-padded to a sublane multiple, rows on lanes.
    n, _ = table.shape
    n_pad = ((n + multiple - 1) // multiple) * multiple
    if n_pad != n:
        table = jnp.pad(table, ((0, n_pad - n), (0, 0)))
    return jnp.asarray(table.T)


class TFPallas:
    """JAX/Pallas port of the TF ('v_u * (v_i + v_t)') model's forward pass."""

    def __init__(self, n_users, n_items, n_periods, embedding_size,
                 loss_type="MSE", seed=0):
        k = jax.random.PRNGKey(seed)
        ku, ki, kt = jax.random.split(k, 3)
        self.user_embedding = _xavier_normal(ku, n_users, embedding_size)
        self.item_embedding = _xavier_normal(ki, n_items, embedding_size)
        self.time_embedding = _xavier_normal(kt, n_periods, embedding_size)
        self.n_items = n_items
        # Kernel-side tables: transposed user table, and the item+time tables
        # concatenated along the contraction (row) axis so one MXU matmul
        # produces item_e + time_e.
        self._utab_t = _pad_rows_and_transpose(self.user_embedding)
        combined = jnp.concatenate([self.item_embedding, self.time_embedding],
                                   axis=0)
        self._ctab_t = _pad_rows_and_transpose(combined)
        self.apply_sigmoid = (loss_type.upper() == "NLL")   # self.m = Sigmoid()
        # TODO(synk): calculate_loss / predict / full_sort_predict (training &
        # ranking paths with CE/MSE/BCE losses) are not ported; only the
        # forward scoring path is implemented here.

    def forward(self, user, item, itemage):
        return tf_forward_pallas(user, item, itemage,
                                 self._utab_t, self._ctab_t,
                                 n_items=self.n_items,
                                 apply_sigmoid=self.apply_sigmoid)

    def forward_reference(self, user, item, itemage):
        # Pure-JAX reference mirroring the PyTorch forward exactly.
        user_e = jnp.take(self.user_embedding, user, axis=0)
        item_e = jnp.take(self.item_embedding, item, axis=0)
        time_e = jnp.take(self.time_embedding, itemage, axis=0)
        s = jnp.sum(user_e * (time_e + item_e), axis=-1).astype(jnp.float32)
        return jax.nn.sigmoid(s) if self.apply_sigmoid else s


# --------------------------------- main ------------------------------------ #

if __name__ == "__main__":
    n_users, n_items, n_periods = 50, 40, 12
    embedding_size = 32

    key = jax.random.PRNGKey(0)

    def make_batch(batch, key):
        ku, ki, kt = jax.random.split(key, 3)
        user = jax.random.randint(ku, (batch,), 0, n_users, dtype=jnp.int32)
        item = jax.random.randint(ki, (batch,), 0, n_items, dtype=jnp.int32)
        itemage = jax.random.randint(kt, (batch,), 0, n_periods, dtype=jnp.int32)
        return user, item, itemage

    ok = True

    # Lane-aligned batch, both loss types (NLL exercises the sigmoid branch).
    user, item, itemage = make_batch(256, key)
    for loss_type in ("MSE", "NLL"):
        model = TFPallas(n_users, n_items, n_periods, embedding_size,
                         loss_type=loss_type, seed=0)
        pred = jax.block_until_ready(model.forward(user, item, itemage))
        ref = jax.block_until_ready(model.forward_reference(user, item, itemage))
        ok = ok and bool(jnp.allclose(pred, ref, atol=1e-5, rtol=1e-5))
        ok = ok and (pred.shape == (256,)) and (pred.dtype == jnp.float32)

    # Non-multiple-of-128 batch exercises the pad-and-slice path.
    user2, item2, itemage2 = make_batch(200, jax.random.PRNGKey(1))
    model = TFPallas(n_users, n_items, n_periods, embedding_size,
                     loss_type="MSE", seed=0)
    pred2 = jax.block_until_ready(model.forward(user2, item2, itemage2))
    ref2 = jax.block_until_ready(model.forward_reference(user2, item2, itemage2))
    ok = ok and bool(jnp.allclose(pred2, ref2, atol=1e-5, rtol=1e-5))
    ok = ok and (pred2.shape == (200,)) and (pred2.dtype == jnp.float32)

    if ok:
        print("KERNEL_OK")
    else:
        print("KERNEL_MISMATCH")
</pallas_src>

<mosaic_0001>
module attributes {stable_mosaic.version = 11 : i64} {
  func.func @_tf_kernel(%arg0: i32, %arg1: memref<3x256xi32, #tpu.memory_space<vmem>>, %arg2: memref<32x56xf32, #tpu.memory_space<vmem>>, %arg3: memref<32x56xf32, #tpu.memory_space<vmem>>, %arg4: memref<1x256xf32, #tpu.memory_space<vmem>>) attributes {dimension_semantics = [#tpu.dimension_semantics<parallel>], iteration_bounds = array<i64: 1>, scalar_prefetch = 0 : i64, scratch_operands = 0 : i64, tpu.core_type = #tpu.core_type<tc>, window_params = [{transform_indices = @transform_0, window_bounds = array<i64: 3, 256>}, {pipeline_mode = #tpu.pipeline_mode<synchronous>, transform_indices = @transform_1, window_bounds = array<i64: 32, 56>}, {pipeline_mode = #tpu.pipeline_mode<synchronous>, transform_indices = @transform_2, window_bounds = array<i64: 32, 56>}, {transform_indices = @transform_3, window_bounds = array<i64: 1, 256>}]} {
    %c0 = arith.constant 0 : index
    %c0_0 = arith.constant 0 : index
    %0 = vector.load %arg1[%c0, %c0_0] : memref<3x256xi32, #tpu.memory_space<vmem>>, vector<3x256xi32>
    %1 = vector.extract_strided_slice %0 {offsets = [0, 0], sizes = [1, 256], strides = [1, 1]} : vector<3x256xi32> to vector<1x256xi32>
    %2 = vector.extract_strided_slice %0 {offsets = [1, 0], sizes = [1, 256], strides = [1, 1]} : vector<3x256xi32> to vector<1x256xi32>
    %3 = vector.extract_strided_slice %0 {offsets = [2, 0], sizes = [1, 256], strides = [1, 1]} : vector<3x256xi32> to vector<1x256xi32>
    %4 = tpu.iota {dimensions = array<i32: 0>} : vector<56x256xi32>
    %5 = vector.broadcast %1 : vector<1x256xi32> to vector<56x256xi32>
    %6 = arith.cmpi eq, %4, %5 : vector<56x256xi32>
    %7 = arith.extui %6 : vector<56x256xi1> to vector<56x256xi32>
    %8 = arith.sitofp %7 : vector<56x256xi32> to vector<56x256xf32>
    %9 = vector.broadcast %2 : vector<1x256xi32> to vector<56x256xi32>
    %10 = arith.cmpi eq, %4, %9 : vector<56x256xi32>
    %11 = vector.broadcast %3 : vector<1x256xi32> to vector<56x256xi32>
    %12 = arith.cmpi eq, %4, %11 : vector<56x256xi32>
    %13 = arith.ori %10, %12 : vector<56x256xi1>
    %14 = arith.extui %13 : vector<56x256xi1> to vector<56x256xi32>
    %15 = arith.sitofp %14 : vector<56x256xi32> to vector<56x256xf32>
    %c0_1 = arith.constant 0 : index
    %c0_2 = arith.constant 0 : index
    %16 = vector.load %arg2[%c0_1, %c0_2] : memref<32x56xf32, #tpu.memory_space<vmem>>, vector<32x56xf32>
    %cst = arith.constant dense<0.000000e+00> : vector<32x256xf32>
    %17 = tpu.matmul %16, %8, %cst {dimension_numbers = #tpu.dot_dimension_numbers<[1], [0], [0], [1], [0, 0, 1, 1], [], []>, precision = #tpu.contract_precision<fp32>} : vector<32x56xf32>, vector<56x256xf32>, vector<32x256xf32> -> vector<32x256xf32>
    %c0_3 = arith.constant 0 : index
    %c0_4 = arith.constant 0 : index
    %18 = vector.load %arg3[%c0_3, %c0_4] : memref<32x56xf32, #tpu.memory_space<vmem>>, vector<32x56xf32>
    %cst_5 = arith.constant dense<0.000000e+00> : vector<32x256xf32>
    %19 = tpu.matmul %18, %15, %cst_5 {dimension_numbers = #tpu.dot_dimension_numbers<[1], [0], [0], [1], [0, 0, 1, 1], [], []>, precision = #tpu.contract_precision<fp32>} : vector<32x56xf32>, vector<56x256xf32>, vector<32x256xf32> -> vector<32x256xf32>
    %20 = arith.mulf %17, %19 : vector<32x256xf32>
    %cst_6 = arith.constant dense<0.000000e+00> : vector<256xf32>
    %21 = vector.multi_reduction <add>, %20, %cst_6 [0] : vector<32x256xf32> to vector<256xf32>
    %22 = vector.shape_cast %21 : vector<256xf32> to vector<1x256xf32>
    %c0_7 = arith.constant 0 : index
    %c0_8 = arith.constant 0 : index
    %23 = vector.load %arg4[%c0_7, %c0_8] : memref<1x256xf32, #tpu.memory_space<vmem>>, vector<1x256xf32>
    tpu.vector_store %arg4[%c0_7, %c0_8], %22 {strides = array<i32>} : memref<1x256xf32, #tpu.memory_space<vmem>>, vector<1x256xf32>,
    return
  }
  func.func @transform_0(%arg0: i32) -> (i32, i32) {
    %c0_i32 = arith.constant 0 : i32
    %c0_i32_0 = arith.constant 0 : i32
    return %c0_i32, %arg0 : i32, i32
  }
  func.func @transform_1(%arg0: i32) -> (i32, i32) {
    %c0_i32 = arith.constant 0 : i32
    %c0_i32_0 = arith.constant 0 : i32
    %c0_i32_1 = arith.constant 0 : i32
    return %c0_i32, %c0_i32_0 : i32, i32
  }
  func.func @transform_2(%arg0: i32) -> (i32, i32) {
    %c0_i32 = arith.constant 0 : i32
    %c0_i32_0 = arith.constant 0 : i32
    %c0_i32_1 = arith.constant 0 : i32
    return %c0_i32, %c0_i32_0 : i32, i32
  }
  func.func @transform_3(%arg0: i32) -> (i32, i32) {
    %c0_i32 = arith.constant 0 : i32
    %c0_i32_0 = arith.constant 0 : i32
    return %c0_i32, %arg0 : i32, i32
  }
}

</mosaic_0001>

<llo_original>
// kernel: tpu_custom_call.1
$region0: #{tpu_custom_call.1}
  #allocation0 [shape = 'u32[]', space=smem, size = 0x4, offset = 0x4, fixed_abs, tag = 'smem constant byte address 0x4 - core index']
  #allocation1 [shape = 'u32[144,128]{1,0:T(1,128)}', space=vmem, size = 0x12000, scoped, tag = 'internal scratch']
  %s0 = inlined_call_operand.hbm [shape: s32[3,256], index: 0, kind: input, shape index: {}]
  %s1 = inlined_call_operand.hbm [shape: f32[32,56], index: 1, kind: input, shape index: {}]
  %s2 = inlined_call_operand.hbm [shape: f32[32,56], index: 2, kind: input, shape index: {}]
  %s3 = inlined_call_operand.hbm [shape: f32[1,256], index: 3, kind: output, shape index: {}]
  %s4 = sld [smem:[#allocation0]]
  $region34: #{tpu_custom_call.1} parent=0
    _
  %s6 = ssub.s32 1, %s4
  %s7 = scalar_select 0, %s6, %s4
  $region1: #{tpu_custom_call.1} parent=0
    #allocation2 [shape = 'u8[4096]{0}', space=vmem, size = 0x1000, scoped, tag = 'input window, operand 0, single buffered']
    #allocation3 [shape = 's32[1]{0}', space=sflag, size = 0x4, scoped, tag = 'scoped memory for tpu_custom_call.1']
    #allocation4 [shape = 's32[1]{0}', space=sflag, size = 0x4, scoped, tag = 'scoped memory for tpu_custom_call.1']
    #allocation5 [shape = 'u8[16384]{0}', space=vmem, size = 0x4000, scoped, tag = 'input window, operand 1, single buffered']
    #allocation6 [shape = 's32[1]{0}', space=sflag, size = 0x4, scoped, tag = 'scoped memory for tpu_custom_call.1']
    #allocation7 [shape = 'u8[16384]{0}', space=vmem, size = 0x4000, scoped, tag = 'input window, operand 2, single buffered']
    #allocation8 [shape = 'u8[1024]{0}', space=vmem, size = 0x400, scoped, tag = 'output window, operand 0, single buffered']
    %8 = vsyncpa [#allocation3], 0
    %9 = vsyncpa [#allocation6], 0
    %10 = vsyncpa [#allocation4], 0
    // Predicated region
    $region2: #{tpu_custom_call.1} parent=1 // pred_check
      _
    $region3: #{tpu_custom_call.1} parent=1 // pred_check_branch
      %12 = sbr.rel (0) target = $region5
    $region4: #{tpu_custom_call.1} parent=1 // pred_region
      %s14 = ssub.s32 128, 128
      %15 = vsyncadd [#allocation3], %s14
      %s17 = sshll.u32 [#allocation2], 4
      %s18 = int_to_ptr.vmem [resolvable:$true] %s17
      %20 = dma.hbm_to_vmem [thread:$0]  %s0, 128, %s18, [#allocation3]
    $region5: #{tpu_custom_call.1} parent=1 // pred_fallthru
      _
    // Predicated region
    $region6: #{tpu_custom_call.1} parent=1 // pred_check
      _
    $region7: #{tpu_custom_call.1} parent=1 // pred_check_branch
      %22 = sbr.rel (0) target = $region9
    $region8: #{tpu_custom_call.1} parent=1 // pred_region
      %s24 = ssub.s32 512, 512
      %25 = vsyncadd [#allocation6], %s24
      %s26 = sshll.u32 [#allocation5], 4
      %s27 = int_to_ptr.vmem [resolvable:$true] %s26
      %32 = dma.hbm_to_vmem [thread:$0]  %s1, 512, %s27, [#allocation6], 128, 128, 8
    $region9: #{tpu_custom_call.1} parent=1 // pred_fallthru
      _
    // Predicated region
    $region10: #{tpu_custom_call.1} parent=1 // pred_check
      _
    $region11: #{tpu_custom_call.1} parent=1 // pred_check_branch
      %34 = sbr.rel (0) target = $region13
    $region12: #{tpu_custom_call.1} parent=1 // pred_region
      %s36 = ssub.s32 512, 512
      %37 = vsyncadd [#allocation6], %s36
      %s38 = sshll.u32 [#allocation7], 4
      %s39 = int_to_ptr.vmem [resolvable:$true] %s38
      %44 = dma.hbm_to_vmem [thread:$0]  %s2, 512, %s39, [#allocation6], 128, 128, 8
    $region13: #{tpu_custom_call.1} parent=1 // pred_fallthru
      _
    // Predicated region
    $region14: #{tpu_custom_call.1} parent=1 // pred_check
      _
    $region15: #{tpu_custom_call.1} parent=1 // pred_check_branch
      %46 = sbr.rel (0) target = $region17
    $region16: #{tpu_custom_call.1} parent=1 // pred_region
      %47 = dma.done [#allocation3], 128
    $region17: #{tpu_custom_call.1} parent=1 // pred_fallthru
      _
    // Predicated region
    $region18: #{tpu_custom_call.1} parent=1 // pred_check
      _
    $region19: #{tpu_custom_call.1} parent=1 // pred_check_branch
      %49 = sbr.rel (0) target = $region21
    $region20: #{tpu_custom_call.1} parent=1 // pred_region
      %50 = dma.done [#allocation6], 512
    $region21: #{tpu_custom_call.1} parent=1 // pred_fallthru
      _
    // Predicated region
    $region22: #{tpu_custom_call.1} parent=1 // pred_check
      _
    $region23: #{tpu_custom_call.1} parent=1 // pred_check_branch
      %52 = sbr.rel (0) target = $region25
    $region24: #{tpu_custom_call.1} parent=1 // pred_region
      %53 = dma.done [#allocation6], 512
    $region25: #{tpu_custom_call.1} parent=1 // pred_fallthru
      _
    %v54 = vld [vmem:[#allocation2] sm:$0x77]
    %v55 = vlaneseq
    %v56 = vshrl.u32 %v55, 7
    %v57 = vadd.s32 %v56, 8
    %v58 = vadd.s32 %v56, 16
    %v59 = vadd.s32 %v56, 24
    %v60 = vadd.s32 %v56, 32
    %v61 = vadd.s32 %v56, 40
    %v62 = vadd.s32 %v56, 48
    %v63 = vlaneseq
    %v64 = vshrl.u32 %v63, 7
    %v65 = vsub.s32 0, %v64
    %v66 = vrot.slane %v54, %v65
    %v67 = vlaneseq
    %v68 = vshrl.u32 %v67, 7
    %v69 = vsub.s32 4, %v68
    %v70 = vrot.slane %v54, %v69
    %v71 = vlaneseq
    %v72 = vshrl.u32 %v71, 7
    %v73 = vsub.s32 0, %v72
    %v74 = vrot.slane %v66, %v73
    %v75 = vlaneseq
    %v76 = vshrl.u32 %v75, 7
    %v77 = vsub.s32 0, %v76
    %v78 = vrot.slane %v70, %v77
    %vm79 = vcmp.eq.s32.totalorder %v56, %v74
    %vm80 = vcmp.eq.s32.totalorder %v56, %v78
    %vm81 = vcmp.eq.s32.totalorder %v57, %v74
    %vm82 = vcmp.eq.s32.totalorder %v57, %v78
    %vm83 = vcmp.eq.s32.totalorder %v58, %v74
    %vm84 = vcmp.eq.s32.totalorder %v58, %v78
    %vm85 = vcmp.eq.s32.totalorder %v59, %v74
    %vm86 = vcmp.eq.s32.totalorder %v59, %v78
    %vm87 = vcmp.eq.s32.totalorder %v60, %v74
    %vm88 = vcmp.eq.s32.totalorder %v60, %v78
    %vm89 = vcmp.eq.s32.totalorder %v61, %v74
    %vm90 = vcmp.eq.s32.totalorder %v61, %v78
    %vm91 = vcmp.eq.s32.totalorder %v62, %v74
    %vm92 = vcmp.eq.s32.totalorder %v62, %v78
    %v93 = vsel %vm79, 1, 0
    %v94 = vsel %vm80, 1, 0
    %v95 = vsel %vm81, 1, 0
    %v96 = vsel %vm82, 1, 0
    %v97 = vsel %vm83, 1, 0
    %v98 = vsel %vm84, 1, 0
    %v99 = vsel %vm85, 1, 0
    %v100 = vsel %vm86, 1, 0
    %v101 = vsel %vm87, 1, 0
    %v102 = vsel %vm88, 1, 0
    %v103 = vsel %vm89, 1, 0
    %v104 = vsel %vm90, 1, 0
    %v105 = vsel %vm91, 1, 0
    %v106 = vsel %vm92, 1, 0
    %v107 = vcvt.s32.f32 %v93
    %v108 = vcvt.s32.f32 %v94
    %v109 = vcvt.s32.f32 %v95
    %v110 = vcvt.s32.f32 %v96
    %v111 = vcvt.s32.f32 %v97
    %v112 = vcvt.s32.f32 %v98
    %v113 = vcvt.s32.f32 %v99
    %v114 = vcvt.s32.f32 %v100
    %v115 = vcvt.s32.f32 %v101
    %v116 = vcvt.s32.f32 %v102
    %v117 = vcvt.s32.f32 %v103
    %v118 = vcvt.s32.f32 %v104
    %v119 = vcvt.s32.f32 %v105
    %v120 = vcvt.s32.f32 %v106
    %v121 = vlaneseq
    %v122 = vshrl.u32 %v121, 7
    %v123 = vsub.s32 1, %v122
    %v124 = vrot.slane %v54, %v123
    %v125 = vlaneseq
    %v126 = vshrl.u32 %v125, 7
    %v127 = vsub.s32 5, %v126
    %v128 = vrot.slane %v54, %v127
    %v129 = vlaneseq
    %v130 = vshrl.u32 %v129, 7
    %v131 = vsub.s32 1, %v130
    %v132 = vrot.slane %v124, %v131
    %v133 = vlaneseq
    %v134 = vshrl.u32 %v133, 7
    %v135 = vsub.s32 1, %v134
    %v136 = vrot.slane %v128, %v135
    %vm137 = vcmp.eq.s32.totalorder %v56, %v132
    %vm138 = vcmp.eq.s32.totalorder %v56, %v136
    %vm139 = vcmp.eq.s32.totalorder %v57, %v132
    %vm140 = vcmp.eq.s32.totalorder %v57, %v136
    %vm141 = vcmp.eq.s32.totalorder %v58, %v132
    %vm142 = vcmp.eq.s32.totalorder %v58, %v136
    %vm143 = vcmp.eq.s32.totalorder %v59, %v132
    %vm144 = vcmp.eq.s32.totalorder %v59, %v136
    %vm145 = vcmp.eq.s32.totalorder %v60, %v132
    %vm146 = vcmp.eq.s32.totalorder %v60, %v136
    %vm147 = vcmp.eq.s32.totalorder %v61, %v132
    %vm148 = vcmp.eq.s32.totalorder %v61, %v136
    %vm149 = vcmp.eq.s32.totalorder %v62, %v132
    %vm150 = vcmp.eq.s32.totalorder %v62, %v136
    %v151 = vlaneseq
    %v152 = vshrl.u32 %v151, 7
    %v153 = vsub.s32 2, %v152
    %v154 = vrot.slane %v54, %v153
    %v155 = vlaneseq
    %v156 = vshrl.u32 %v155, 7
    %v157 = vsub.s32 6, %v156
    %v158 = vrot.slane %v54, %v157
    %v159 = vlaneseq
    %v160 = vshrl.u32 %v159, 7
    %v161 = vsub.s32 2, %v160
    %v162 = vrot.slane %v154, %v161
    %v163 = vlaneseq
    %v164 = vshrl.u32 %v163, 7
    %v165 = vsub.s32 2, %v164
    %v166 = vrot.slane %v158, %v165
    %vm167 = vcmp.eq.s32.totalorder %v56, %v162
    %vm168 = vcmp.eq.s32.totalorder %v56, %v166
    %vm169 = vcmp.eq.s32.totalorder %v57, %v162
    %vm170 = vcmp.eq.s32.totalorder %v57, %v166
    %vm171 = vcmp.eq.s32.totalorder %v58, %v162
    %vm172 = vcmp.eq.s32.totalorder %v58, %v166
    %vm173 = vcmp.eq.s32.totalorder %v59, %v162
    %vm174 = vcmp.eq.s32.totalorder %v59, %v166
    %vm175 = vcmp.eq.s32.totalorder %v60, %v162
    %vm176 = vcmp.eq.s32.totalorder %v60, %v166
    %vm177 = vcmp.eq.s32.totalorder %v61, %v162
    %vm178 = vcmp.eq.s32.totalorder %v61, %v166
    %vm179 = vcmp.eq.s32.totalorder %v62, %v162
    %vm180 = vcmp.eq.s32.totalorder %v62, %v166
    %vm181 = vmor %vm137, %vm167
    %vm182 = vmor %vm138, %vm168
    %vm183 = vmor %vm139, %vm169
    %vm184 = vmor %vm140, %vm170
    %vm185 = vmor %vm141, %vm171
    %vm186 = vmor %vm142, %vm172
    %vm187 = vmor %vm143, %vm173
    %vm188 = vmor %vm144, %vm174
    %vm189 = vmor %vm145, %vm175
    %vm190 = vmor %vm146, %vm176
    %vm191 = vmor %vm147, %vm177
    %vm192 = vmor %vm148, %vm178
    %vm193 = vmor %vm149, %vm179
    %vm194 = vmor %vm150, %vm180
    %v195 = vsel %vm181, 1, 0
    %v196 = vsel %vm182, 1, 0
    %v197 = vsel %vm183, 1, 0
    %v198 = vsel %vm184, 1, 0
    %v199 = vsel %vm185, 1, 0
    %v200 = vsel %vm186, 1, 0
    %v201 = vsel %vm187, 1, 0
    %v202 = vsel %vm188, 1, 0
    %v203 = vsel %vm189, 1, 0
    %v204 = vsel %vm190, 1, 0
    %v205 = vsel %vm191, 1, 0
    %v206 = vsel %vm192, 1, 0
    %v207 = vsel %vm193, 1, 0
    %v208 = vsel %vm194, 1, 0
    %v209 = vcvt.s32.f32 %v195
    %v210 = vcvt.s32.f32 %v196
    %v211 = vcvt.s32.f32 %v197
    %v212 = vcvt.s32.f32 %v198
    %v213 = vcvt.s32.f32 %v199
    %v214 = vcvt.s32.f32 %v200
    %v215 = vcvt.s32.f32 %v201
    %v216 = vcvt.s32.f32 %v202
    %v217 = vcvt.s32.f32 %v203
    %v218 = vcvt.s32.f32 %v204
    %v219 = vcvt.s32.f32 %v205
    %v220 = vcvt.s32.f32 %v206
    %v221 = vcvt.s32.f32 %v207
    %v222 = vcvt.s32.f32 %v208
    %v223 = vld [vmem:[#allocation5] sm:$0xff]
    %v224 = vld [vmem:[#allocation5 + $0x8] sm:$0xff]
    %v225 = vld [vmem:[#allocation5 + $0x10] sm:$0xff]
    %v226 = vld [vmem:[#allocation5 + $0x18] sm:$0xff]
    %vm227 = vcmask 457728
    %v229 = vsel %vm227, %v223, 0
    %v232 = vsel %vm227, %v224, 0
    %v235 = vsel %vm227, %v225, 0
    %v238 = vsel %vm227, %v226, 0
    %240 = vmatprep.subr.mxu0 0.0
    %241 = vmatpush1.msra.mxu0 0.0
    %242 = vmatprep.subr.mxu0 0.0
    %243 = vmatpush1.msra.mxu0 0.0
    %244 = vmatprep.subr.mxu0 0.0
    %245 = vmatpush1.msra.mxu0 0.0
    %246 = vmatprep.subr.mxu0 0.0
    %247 = vmatpush1.msra.mxu0 0.0
    %248 = vmatprep.subr.mxu0 0.0
    %249 = vmatpush1.msra.mxu0 0.0
    %250 = vmatprep.subr.mxu0 0.0
    %251 = vmatpush1.msra.mxu0 0.0
    %252 = vmatprep.subr.mxu0 0.0
    %253 = vmatpush1.msra.mxu0 0.0
    %254 = vmatprep.subr.mxu0 0.0
    %255 = vmatpush1.msra.mxu0 0.0
    %256 = vmatprep.subr.mxu0 0.0
    %257 = vmatpush1.msra.mxu0 0.0
    %v258 = vand.u32 %v120, 4294901760
    %259 = vmatprep.subr.mxu0 %v258
    %v260 = vand.u32 %v119, 4294901760
    %261 = vmatpush1.msra.mxu0 %v260
    %v262 = vand.u32 %v118, 4294901760
    %263 = vmatprep.subr.mxu0 %v262
    %v264 = vand.u32 %v117, 4294901760
    %265 = vmatpush1.msra.mxu0 %v264
    %v266 = vand.u32 %v116, 4294901760
    %267 = vmatprep.subr.mxu0 %v266
    %v268 = vand.u32 %v115, 4294901760
    %269 = vmatpush1.msra.mxu0 %v268
    %v270 = vand.u32 %v114, 4294901760
    %271 = vmatprep.subr.mxu0 %v270
    %v272 = vand.u32 %v113, 4294901760
    %273 = vmatpush1.msra.mxu0 %v272
    %v274 = vand.u32 %v112, 4294901760
    %275 = vmatprep.subr.mxu0 %v274
    %v276 = vand.u32 %v111, 4294901760
    %277 = vmatpush1.msra.mxu0 %v276
    %v278 = vand.u32 %v110, 4294901760
    %279 = vmatprep.subr.mxu0 %v278
    %v280 = vand.u32 %v109, 4294901760
    %281 = vmatpush1.msra.mxu0 %v280
    %v282 = vand.u32 %v108, 4294901760
    %283 = vmatprep.subr.mxu0 %v282
    %v284 = vand.u32 %v107, 4294901760
    %285 = vmatpush1.msra.mxu0 %v284
    %286 = vmatprep.subr.mxu0 0.0
    %287 = vmatpush2.msra.mxu0 0.0
    %288 = vmatprep.subr.mxu0 0.0
    %289 = vmatpush2.msra.mxu0 0.0
    %290 = vmatprep.subr.mxu0 0.0
    %291 = vmatpush2.msra.mxu0 0.0
    %292 = vmatprep.subr.mxu0 0.0
    %293 = vmatpush2.msra.mxu0 0.0
    %294 = vmatprep.subr.mxu0 0.0
    %295 = vmatpush2.msra.mxu0 0.0
    %296 = vmatprep.subr.mxu0 0.0
    %297 = vmatpush2.msra.mxu0 0.0
    %298 = vmatprep.subr.mxu0 0.0
    %299 = vmatpush2.msra.mxu0 0.0
    %300 = vmatprep.subr.mxu0 0.0
    %301 = vmatpush2.msra.mxu0 0.0
    %302 = vmatprep.subr.mxu0 0.0
    %303 = vmatpush2.msra.mxu0 0.0
    %304 = vmatprep.subr.mxu0 0.0
    %305 = vmatpush2.msra.mxu0 0.0
    %306 = vmatprep.subr.mxu0 0.0
    %307 = vmatpush2.msra.mxu0 0.0
    %308 = vmatprep.subr.mxu0 0.0
    %309 = vmatpush2.msra.mxu0 0.0
    %310 = vmatprep.subr.mxu0 0.0
    %311 = vmatpush2.msra.mxu0 0.0
    %312 = vmatprep.subr.mxu0 0.0
    %313 = vmatpush2.msra.mxu0 0.0
    %314 = vmatprep.subr.mxu0 0.0
    %315 = vmatpush2.msra.mxu0 0.0
    %316 = vmatprep.subr.mxu0 0.0
    %317 = vmatpush2.msra.mxu0 0.0
    %318 = vmatprep.mubr.f32.mxu0 0.0
    %v319 = vand.u32 %v229, 4294901760
    %v320 = vsub.f32 %v229, %v319
    %v321 = vand.u32 %v320, 4294901760
    %v322 = vsub.f32 %v320, %v321
    %v323 = vand.u32 %v322, 4294901760
    %324 = vmatmul.mubr.f32.gmra.mxu0 %v323
    %v325 = vpop.f32.mrf.mxu0
    %v326 = vadd.f32 0.0, %v325
    %v327 = vpop.f32.mrf.mxu0
    %v328 = vadd.f32 0.0, %v327
    %329 = vmatprep.mubr.f32.mxu0 0.0
    %v330 = vand.u32 %v232, 4294901760
    %v331 = vsub.f32 %v232, %v330
    %v332 = vand.u32 %v331, 4294901760
    %v333 = vsub.f32 %v331, %v332
    %v334 = vand.u32 %v333, 4294901760
    %335 = vmatmul.mubr.f32.gmra.mxu0 %v334
    %v336 = vpop.f32.mrf.mxu0
    %v337 = vadd.f32 0.0, %v336
    %v338 = vpop.f32.mrf.mxu0
    %v339 = vadd.f32 0.0, %v338
    %340 = vmatprep.mubr.f32.mxu0 0.0
    %v341 = vand.u32 %v235, 4294901760
    %v342 = vsub.f32 %v235, %v341
    %v343 = vand.u32 %v342, 4294901760
    %v344 = vsub.f32 %v342, %v343
    %v345 = vand.u32 %v344, 4294901760
    %346 = vmatmul.mubr.f32.gmra.mxu0 %v345
    %v347 = vpop.f32.mrf.mxu0
    %v348 = vadd.f32 0.0, %v347
    %v349 = vpop.f32.mrf.mxu0
    %v350 = vadd.f32 0.0, %v349
    %351 = vmatprep.mubr.f32.mxu0 0.0
    %v352 = vand.u32 %v238, 4294901760
    %v353 = vsub.f32 %v238, %v352
    %v354 = vand.u32 %v353, 4294901760
    %v355 = vsub.f32 %v353, %v354
    %v356 = vand.u32 %v355, 4294901760
    %357 = vmatmul.mubr.f32.gmra.mxu0 %v356
    %v358 = vpop.f32.mrf.mxu0
    %v359 = vadd.f32 0.0, %v358
    %v360 = vpop.f32.mrf.mxu0
    %v361 = vadd.f32 0.0, %v360
    %362 = vdwg.mxu0
    %363 = vmatprep.subr.mxu0 0.0
    %364 = vmatpush1.msra.mxu0 0.0
    %365 = vmatprep.subr.mxu0 0.0
    %366 = vmatpush1.msra.mxu0 0.0
    %367 = vmatprep.subr.mxu0 0.0
    %368 = vmatpush1.msra.mxu0 0.0
    %369 = vmatprep.subr.mxu0 0.0
    %370 = vmatpush1.msra.mxu0 0.0
    %371 = vmatprep.subr.mxu0 0.0
    %372 = vmatpush1.msra.mxu0 0.0
    %373 = vmatprep.subr.mxu0 0.0
    %374 = vmatpush1.msra.mxu0 0.0
    %375 = vmatprep.subr.mxu0 0.0
    %376 = vmatpush1.msra.mxu0 0.0
    %377 = vmatprep.subr.mxu0 0.0
    %378 = vmatpush1.msra.mxu0 0.0
    %379 = vmatprep.subr.mxu0 0.0
    %380 = vmatpush1.msra.mxu0 0.0
    %v381 = vand.u32 %v120, 4294901760
    %v382 = vsub.f32 %v120, %v381
    %v383 = vand.u32 %v382, 4294901760
    %v384 = vsub.f32 %v382, %v383
    %v385 = vand.u32 %v384, 4294901760
    %386 = vmatprep.subr.mxu0 %v385
    %v387 = vand.u32 %v119, 4294901760
    %v388 = vsub.f32 %v119, %v387
    %v389 = vand.u32 %v388, 4294901760
    %v390 = vsub.f32 %v388, %v389
    %v391 = vand.u32 %v390, 4294901760
    %392 = vmatpush1.msra.mxu0 %v391
    %v393 = vand.u32 %v118, 4294901760
    %v394 = vsub.f32 %v118, %v393
    %v395 = vand.u32 %v394, 4294901760
    %v396 = vsub.f32 %v394, %v395
    %v397 = vand.u32 %v396, 4294901760
    %398 = vmatprep.subr.mxu0 %v397
    %v399 = vand.u32 %v117, 4294901760
    %v400 = vsub.f32 %v117, %v399
    %v401 = vand.u32 %v400, 4294901760
    %v402 = vsub.f32 %v400, %v401
    %v403 = vand.u32 %v402, 4294901760
    %404 = vmatpush1.msra.mxu0 %v403
    %v405 = vand.u32 %v116, 4294901760
    %v406 = vsub.f32 %v116, %v405
    %v407 = vand.u32 %v406, 4294901760
    %v408 = vsub.f32 %v406, %v407
    %v409 = vand.u32 %v408, 4294901760
    %410 = vmatprep.subr.mxu0 %v409
    %v411 = vand.u32 %v115, 4294901760
    %v412 = vsub.f32 %v115, %v411
    %v413 = vand.u32 %v412, 4294901760
    %v414 = vsub.f32 %v412, %v413
    %v415 = vand.u32 %v414, 4294901760
    %416 = vmatpush1.msra.mxu0 %v415
    %v417 = vand.u32 %v114, 4294901760
    %v418 = vsub.f32 %v114, %v417
    %v419 = vand.u32 %v418, 4294901760
    %v420 = vsub.f32 %v418, %v419
    %v421 = vand.u32 %v420, 4294901760
    %422 = vmatprep.subr.mxu0 %v421
    %v423 = vand.u32 %v113, 4294901760
    %v424 = vsub.f32 %v113, %v423
    %v425 = vand.u32 %v424, 4294901760
    %v426 = vsub.f32 %v424, %v425
    %v427 = vand.u32 %v426, 4294901760
    %428 = vmatpush1.msra.mxu0 %v427
    %v429 = vand.u32 %v112, 4294901760
    %v430 = vsub.f32 %v112, %v429
    %v431 = vand.u32 %v430, 4294901760
    %v432 = vsub.f32 %v430, %v431
    %v433 = vand.u32 %v432, 4294901760
    %434 = vmatprep.subr.mxu0 %v433
    %v435 = vand.u32 %v111, 4294901760
    %v436 = vsub.f32 %v111, %v435
    %v437 = vand.u32 %v436, 4294901760
    %v438 = vsub.f32 %v436, %v437
    %v439 = vand.u32 %v438, 4294901760
    %440 = vmatpush1.msra.mxu0 %v439
    %v441 = vand.u32 %v110, 4294901760
    %v442 = vsub.f32 %v110, %v441
    %v443 = vand.u32 %v442, 4294901760
    %v444 = vsub.f32 %v442, %v443
    %v445 = vand.u32 %v444, 4294901760
    %446 = vmatprep.subr.mxu0 %v445
    %v447 = vand.u32 %v109, 4294901760
    %v448 = vsub.f32 %v109, %v447
    %v449 = vand.u32 %v448, 4294901760
    %v450 = vsub.f32 %v448, %v449
    %v451 = vand.u32 %v450, 4294901760
    %452 = vmatpush1.msra.mxu0 %v451
    %v453 = vand.u32 %v108, 4294901760
    %v454 = vsub.f32 %v108, %v453
    %v455 = vand.u32 %v454, 4294901760
    %v456 = vsub.f32 %v454, %v455
    %v457 = vand.u32 %v456, 4294901760
    %458 = vmatprep.subr.mxu0 %v457
    %v459 = vand.u32 %v107, 4294901760
    %v460 = vsub.f32 %v107, %v459
    %v461 = vand.u32 %v460, 4294901760
    %v462 = vsub.f32 %v460, %v461
    %v463 = vand.u32 %v462, 4294901760
    %464 = vmatpush1.msra.mxu0 %v463
    %465 = vmatprep.subr.mxu0 0.0
    %466 = vmatpush2.msra.mxu0 0.0
    %467 = vmatprep.subr.mxu0 0.0
    %468 = vmatpush2.msra.mxu0 0.0
    %469 = vmatprep.subr.mxu0 0.0
    %470 = vmatpush2.msra.mxu0 0.0
    %471 = vmatprep.subr.mxu0 0.0
    %472 = vmatpush2.msra.mxu0 0.0
    %473 = vmatprep.subr.mxu0 0.0
    %474 = vmatpush2.msra.mxu0 0.0
    %475 = vmatprep.subr.mxu0 0.0
    %476 = vmatpush2.msra.mxu0 0.0
    %477 = vmatprep.subr.mxu0 0.0
    %478 = vmatpush2.msra.mxu0 0.0
    %479 = vmatprep.subr.mxu0 0.0
    %480 = vmatpush2.msra.mxu0 0.0
    %481 = vmatprep.subr.mxu0 0.0
    %482 = vmatpush2.msra.mxu0 0.0
    %483 = vmatprep.subr.mxu0 0.0
    %484 = vmatpush2.msra.mxu0 0.0
    %485 = vmatprep.subr.mxu0 0.0
    %486 = vmatpush2.msra.mxu0 0.0
    %487 = vmatprep.subr.mxu0 0.0
    %488 = vmatpush2.msra.mxu0 0.0
    %489 = vmatprep.subr.mxu0 0.0
    %490 = vmatpush2.msra.mxu0 0.0
    %491 = vmatprep.subr.mxu0 0.0
    %492 = vmatpush2.msra.mxu0 0.0
    %493 = vmatprep.subr.mxu0 0.0
    %494 = vmatpush2.msra.mxu0 0.0
    %495 = vmatprep.subr.mxu0 0.0
    %496 = vmatpush2.msra.mxu0 0.0
    %497 = vmatprep.mubr.f32.mxu0 0.0
    %v498 = vand.u32 %v229, 4294901760
    %499 = vmatmul.mubr.f32.gmra.mxu0 %v498
    %v500 = vpop.f32.mrf.mxu0
    %v501 = vadd.f32 %v326, %v500
    %v502 = vpop.f32.mrf.mxu0
    %v503 = vadd.f32 %v328, %v502
    %504 = vmatprep.mubr.f32.mxu0 0.0
    %v505 = vand.u32 %v232, 4294901760
    %506 = vmatmul.mubr.f32.gmra.mxu0 %v505
    %v507 = vpop.f32.mrf.mxu0
    %v508 = vadd.f32 %v337, %v507
    %v509 = vpop.f32.mrf.mxu0
    %v510 = vadd.f32 %v339, %v509
    %511 = vmatprep.mubr.f32.mxu0 0.0
    %v512 = vand.u32 %v235, 4294901760
    %513 = vmatmul.mubr.f32.gmra.mxu0 %v512
    %v514 = vpop.f32.mrf.mxu0
    %v515 = vadd.f32 %v348, %v514
    %v516 = vpop.f32.mrf.mxu0
    %v517 = vadd.f32 %v350, %v516
    %518 = vmatprep.mubr.f32.mxu0 0.0
    %v519 = vand.u32 %v238, 4294901760
    %520 = vmatmul.mubr.f32.gmra.mxu0 %v519
    %v521 = vpop.f32.mrf.mxu0
    %v522 = vadd.f32 %v359, %v521
    %v523 = vpop.f32.mrf.mxu0
    %v524 = vadd.f32 %v361, %v523
    %525 = vdwg.mxu0
    %526 = vmatprep.subr.mxu0 0.0
    %527 = vmatpush1.msra.mxu0 0.0
    %528 = vmatprep.subr.mxu0 0.0
    %529 = vmatpush1.msra.mxu0 0.0
    %530 = vmatprep.subr.mxu0 0.0
    %531 = vmatpush1.msra.mxu0 0.0
    %532 = vmatprep.subr.mxu0 0.0
    %533 = vmatpush1.msra.mxu0 0.0
    %534 = vmatprep.subr.mxu0 0.0
    %535 = vmatpush1.msra.mxu0 0.0
    %536 = vmatprep.subr.mxu0 0.0
    %537 = vmatpush1.msra.mxu0 0.0
    %538 = vmatprep.subr.mxu0 0.0
    %539 = vmatpush1.msra.mxu0 0.0
    %540 = vmatprep.subr.mxu0 0.0
    %541 = vmatpush1.msra.mxu0 0.0
    %542 = vmatprep.subr.mxu0 0.0
    %543 = vmatpush1.msra.mxu0 0.0
    %v544 = vand.u32 %v120, 4294901760
    %v545 = vsub.f32 %v120, %v544
    %546 = vmatprep.subr.mxu0 %v545
    %v547 = vand.u32 %v119, 4294901760
    %v548 = vsub.f32 %v119, %v547
    %549 = vmatpush1.msra.mxu0 %v548
    %v550 = vand.u32 %v118, 4294901760
    %v551 = vsub.f32 %v118, %v550
    %552 = vmatprep.subr.mxu0 %v551
    %v553 = vand.u32 %v117, 4294901760
    %v554 = vsub.f32 %v117, %v553
    %555 = vmatpush1.msra.mxu0 %v554
    %v556 = vand.u32 %v116, 4294901760
    %v557 = vsub.f32 %v116, %v556
    %558 = vmatprep.subr.mxu0 %v557
    %v559 = vand.u32 %v115, 4294901760
    %v560 = vsub.f32 %v115, %v559
    %561 = vmatpush1.msra.mxu0 %v560
    %v562 = vand.u32 %v114, 4294901760
    %v563 = vsub.f32 %v114, %v562
    %564 = vmatprep.subr.mxu0 %v563
    %v565 = vand.u32 %v113, 4294901760
    %v566 = vsub.f32 %v113, %v565
    %567 = vmatpush1.msra.mxu0 %v566
    %v568 = vand.u32 %v112, 4294901760
    %v569 = vsub.f32 %v112, %v568
    %570 = vmatprep.subr.mxu0 %v569
    %v571 = vand.u32 %v111, 4294901760
    %v572 = vsub.f32 %v111, %v571
    %573 = vmatpush1.msra.mxu0 %v572
    %v574 = vand.u32 %v110, 4294901760
    %v575 = vsub.f32 %v110, %v574
    %576 = vmatprep.subr.mxu0 %v575
    %v577 = vand.u32 %v109, 4294901760
    %v578 = vsub.f32 %v109, %v577
    %579 = vmatpush1.msra.mxu0 %v578
    %v580 = vand.u32 %v108, 4294901760
    %v581 = vsub.f32 %v108, %v580
    %582 = vmatprep.subr.mxu0 %v581
    %v583 = vand.u32 %v107, 4294901760
    %v584 = vsub.f32 %v107, %v583
    %585 = vmatpush1.msra.mxu0 %v584
    %586 = vmatprep.subr.mxu0 0.0
    %587 = vmatpush2.msra.mxu0 0.0
    %588 = vmatprep.subr.mxu0 0.0
    %589 = vmatpush2.msra.mxu0 0.0
    %590 = vmatprep.subr.mxu0 0.0
    %591 = vmatpush2.msra.mxu0 0.0
    %592 = vmatprep.subr.mxu0 0.0
    %593 = vmatpush2.msra.mxu0 0.0
    %594 = vmatprep.subr.mxu0 0.0
    %595 = vmatpush2.msra.mxu0 0.0
    %596 = vmatprep.subr.mxu0 0.0
    %597 = vmatpush2.msra.mxu0 0.0
    %598 = vmatprep.subr.mxu0 0.0
    %599 = vmatpush2.msra.mxu0 0.0
    %600 = vmatprep.subr.mxu0 0.0
    %601 = vmatpush2.msra.mxu0 0.0
    %602 = vmatprep.subr.mxu0 0.0
    %603 = vmatpush2.msra.mxu0 0.0
    %604 = vmatprep.subr.mxu0 0.0
    %605 = vmatpush2.msra.mxu0 0.0
    %606 = vmatprep.subr.mxu0 0.0
    %607 = vmatpush2.msra.mxu0 0.0
    %608 = vmatprep.subr.mxu0 0.0
    %609 = vmatpush2.msra.mxu0 0.0
    %610 = vmatprep.subr.mxu0 0.0
    %611 = vmatpush2.msra.mxu0 0.0
    %612 = vmatprep.subr.mxu0 0.0
    %613 = vmatpush2.msra.mxu0 0.0
    %614 = vmatprep.subr.mxu0 0.0
    %615 = vmatpush2.msra.mxu0 0.0
    %616 = vmatprep.subr.mxu0 0.0
    %617 = vmatpush2.msra.mxu0 0.0
    %618 = vmatprep.mubr.f32.mxu0 0.0
    %v619 = vand.u32 %v229, 4294901760
    %v620 = vsub.f32 %v229, %v619
    %621 = vmatmul.mubr.f32.gmra.mxu0 %v620
    %v622 = vpop.f32.mrf.mxu0
    %v623 = vadd.f32 %v501, %v622
    %v624 = vpop.f32.mrf.mxu0
    %v625 = vadd.f32 %v503, %v624
    %626 = vmatprep.mubr.f32.mxu0 0.0
    %v627 = vand.u32 %v232, 4294901760
    %v628 = vsub.f32 %v232, %v627
    %629 = vmatmul.mubr.f32.gmra.mxu0 %v628
    %v630 = vpop.f32.mrf.mxu0
    %v631 = vadd.f32 %v508, %v630
    %v632 = vpop.f32.mrf.mxu0
    %v633 = vadd.f32 %v510, %v632
    %634 = vmatprep.mubr.f32.mxu0 0.0
    %v635 = vand.u32 %v235, 4294901760
    %v636 = vsub.f32 %v235, %v635
    %637 = vmatmul.mubr.f32.gmra.mxu0 %v636
    %v638 = vpop.f32.mrf.mxu0
    %v639 = vadd.f32 %v515, %v638
    %v640 = vpop.f32.mrf.mxu0
    %v641 = vadd.f32 %v517, %v640
    %642 = vmatprep.mubr.f32.mxu0 0.0
    %v643 = vand.u32 %v238, 4294901760
    %v644 = vsub.f32 %v238, %v643
    %645 = vmatmul.mubr.f32.gmra.mxu0 %v644
    %v646 = vpop.f32.mrf.mxu0
    %v647 = vadd.f32 %v522, %v646
    %v648 = vpop.f32.mrf.mxu0
    %v649 = vadd.f32 %v524, %v648
    %650 = vdwg.mxu0
    %651 = vmatprep.subr.mxu0 0.0
    %652 = vmatpush1.msra.mxu0 0.0
    %653 = vmatprep.subr.mxu0 0.0
    %654 = vmatpush1.msra.mxu0 0.0
    %655 = vmatprep.subr.mxu0 0.0
    %656 = vmatpush1.msra.mxu0 0.0
    %657 = vmatprep.subr.mxu0 0.0
    %658 = vmatpush1.msra.mxu0 0.0
    %659 = vmatprep.subr.mxu0 0.0
    %660 = vmatpush1.msra.mxu0 0.0
    %661 = vmatprep.subr.mxu0 0.0
    %662 = vmatpush1.msra.mxu0 0.0
    %663 = vmatprep.subr.mxu0 0.0
    %664 = vmatpush1.msra.mxu0 0.0
    %665 = vmatprep.subr.mxu0 0.0
    %666 = vmatpush1.msra.mxu0 0.0
    %667 = vmatprep.subr.mxu0 0.0
    %668 = vmatpush1.msra.mxu0 0.0
    %v669 = vand.u32 %v120, 4294901760
    %670 = vmatprep.subr.mxu0 %v669
    %v671 = vand.u32 %v119, 4294901760
    %672 = vmatpush1.msra.mxu0 %v671
    %v673 = vand.u32 %v118, 4294901760
    %674 = vmatprep.subr.mxu0 %v673
    %v675 = vand.u32 %v117, 4294901760
    %676 = vmatpush1.msra.mxu0 %v675
    %v677 = vand.u32 %v116, 4294901760
    %678 = vmatprep.subr.mxu0 %v677
    %v679 = vand.u32 %v115, 4294901760
    %680 = vmatpush1.msra.mxu0 %v679
    %v681 = vand.u32 %v114, 4294901760
    %682 = vmatprep.subr.mxu0 %v681
    %v683 = vand.u32 %v113, 4294901760
    %684 = vmatpush1.msra.mxu0 %v683
    %v685 = vand.u32 %v112, 4294901760
    %686 = vmatprep.subr.mxu0 %v685
    %v687 = vand.u32 %v111, 4294901760
    %688 = vmatpush1.msra.mxu0 %v687
    %v689 = vand.u32 %v110, 4294901760
    %690 = vmatprep.subr.mxu0 %v689
    %v691 = vand.u32 %v109, 4294901760
    %692 = vmatpush1.msra.mxu0 %v691
    %v693 = vand.u32 %v108, 4294901760
    %694 = vmatprep.subr.mxu0 %v693
    %v695 = vand.u32 %v107, 4294901760
    %696 = vmatpush1.msra.mxu0 %v695
    %697 = vmatprep.subr.mxu0 0.0
    %698 = vmatpush2.msra.mxu0 0.0
    %699 = vmatprep.subr.mxu0 0.0
    %700 = vmatpush2.msra.mxu0 0.0
    %701 = vmatprep.subr.mxu0 0.0
    %702 = vmatpush2.msra.mxu0 0.0
    %703 = vmatprep.subr.mxu0 0.0
    %704 = vmatpush2.msra.mxu0 0.0
    %705 = vmatprep.subr.mxu0 0.0
    %706 = vmatpush2.msra.mxu0 0.0
    %707 = vmatprep.subr.mxu0 0.0
    %708 = vmatpush2.msra.mxu0 0.0
    %709 = vmatprep.subr.mxu0 0.0
    %710 = vmatpush2.msra.mxu0 0.0
    %711 = vmatprep.subr.mxu0 0.0
    %712 = vmatpush2.msra.mxu0 0.0
    %713 = vmatprep.subr.mxu0 0.0
    %714 = vmatpush2.msra.mxu0 0.0
    %715 = vmatprep.subr.mxu0 0.0
    %716 = vmatpush2.msra.mxu0 0.0
    %717 = vmatprep.subr.mxu0 0.0
    %718 = vmatpush2.msra.mxu0 0.0
    %719 = vmatprep.subr.mxu0 0.0
    %720 = vmatpush2.msra.mxu0 0.0
    %721 = vmatprep.subr.mxu0 0.0
    %722 = vmatpush2.msra.mxu0 0.0
    %723 = vmatprep.subr.mxu0 0.0
    %724 = vmatpush2.msra.mxu0 0.0
    %725 = vmatprep.subr.mxu0 0.0
    %726 = vmatpush2.msra.mxu0 0.0
    %727 = vmatprep.subr.mxu0 0.0
    %728 = vmatpush2.msra.mxu0 0.0
    %729 = vmatprep.mubr.f32.mxu0 0.0
    %v730 = vand.u32 %v229, 4294901760
    %v731 = vsub.f32 %v229, %v730
    %v732 = vand.u32 %v731, 4294901760
    %733 = vmatmul.mubr.f32.gmra.mxu0 %v732
    %v734 = vpop.f32.mrf.mxu0
    %v735 = vadd.f32 %v623, %v734
    %v736 = vpop.f32.mrf.mxu0
    %v737 = vadd.f32 %v625, %v736
    %738 = vmatprep.mubr.f32.mxu0 0.0
    %v739 = vand.u32 %v232, 4294901760
    %v740 = vsub.f32 %v232, %v739
    %v741 = vand.u32 %v740, 4294901760
    %742 = vmatmul.mubr.f32.gmra.mxu0 %v741
    %v743 = vpop.f32.mrf.mxu0
    %v744 = vadd.f32 %v631, %v743
    %v745 = vpop.f32.mrf.mxu0
    %v746 = vadd.f32 %v633, %v745
    %747 = vmatprep.mubr.f32.mxu0 0.0
    %v748 = vand.u32 %v235, 4294901760
    %v749 = vsub.f32 %v235, %v748
    %v750 = vand.u32 %v749, 4294901760
    %751 = vmatmul.mubr.f32.gmra.mxu0 %v750
    %v752 = vpop.f32.mrf.mxu0
    %v753 = vadd.f32 %v639, %v752
    %v754 = vpop.f32.mrf.mxu0
    %v755 = vadd.f32 %v641, %v754
    %756 = vmatprep.mubr.f32.mxu0 0.0
    %v757 = vand.u32 %v238, 4294901760
    %v758 = vsub.f32 %v238, %v757
    %v759 = vand.u32 %v758, 4294901760
    %760 = vmatmul.mubr.f32.gmra.mxu0 %v759
    %v761 = vpop.f32.mrf.mxu0
    %v762 = vadd.f32 %v647, %v761
    %v763 = vpop.f32.mrf.mxu0
    %v764 = vadd.f32 %v649, %v763
    %765 = vdwg.mxu0
    %766 = vmatprep.subr.mxu0 0.0
    %767 = vmatpush1.msra.mxu0 0.0
    %768 = vmatprep.subr.mxu0 0.0
    %769 = vmatpush1.msra.mxu0 0.0
    %770 = vmatprep.subr.mxu0 0.0
    %771 = vmatpush1.msra.mxu0 0.0
    %772 = vmatprep.subr.mxu0 0.0
    %773 = vmatpush1.msra.mxu0 0.0
    %774 = vmatprep.subr.mxu0 0.0
    %775 = vmatpush1.msra.mxu0 0.0
    %776 = vmatprep.subr.mxu0 0.0
    %777 = vmatpush1.msra.mxu0 0.0
    %778 = vmatprep.subr.mxu0 0.0
    %779 = vmatpush1.msra.mxu0 0.0
    %780 = vmatprep.subr.mxu0 0.0
    %781 = vmatpush1.msra.mxu0 0.0
    %782 = vmatprep.subr.mxu0 0.0
    %783 = vmatpush1.msra.mxu0 0.0
    %v784 = vand.u32 %v120, 4294901760
    %v785 = vsub.f32 %v120, %v784
    %v786 = vand.u32 %v785, 4294901760
    %787 = vmatprep.subr.mxu0 %v786
    %v788 = vand.u32 %v119, 4294901760
    %v789 = vsub.f32 %v119, %v788
    %v790 = vand.u32 %v789, 4294901760
    %791 = vmatpush1.msra.mxu0 %v790
    %v792 = vand.u32 %v118, 4294901760
    %v793 = vsub.f32 %v118, %v792
    %v794 = vand.u32 %v793, 4294901760
    %795 = vmatprep.subr.mxu0 %v794
    %v796 = vand.u32 %v117, 4294901760
    %v797 = vsub.f32 %v117, %v796
    %v798 = vand.u32 %v797, 4294901760
    %799 = vmatpush1.msra.mxu0 %v798
    %v800 = vand.u32 %v116, 4294901760
    %v801 = vsub.f32 %v116, %v800
    %v802 = vand.u32 %v801, 4294901760
    %803 = vmatprep.subr.mxu0 %v802
    %v804 = vand.u32 %v115, 4294901760
    %v805 = vsub.f32 %v115, %v804
    %v806 = vand.u32 %v805, 4294901760
    %807 = vmatpush1.msra.mxu0 %v806
    %v808 = vand.u32 %v114, 4294901760
    %v809 = vsub.f32 %v114, %v808
    %v810 = vand.u32 %v809, 4294901760
    %811 = vmatprep.subr.mxu0 %v810
    %v812 = vand.u32 %v113, 4294901760
    %v813 = vsub.f32 %v113, %v812
    %v814 = vand.u32 %v813, 4294901760
    %815 = vmatpush1.msra.mxu0 %v814
    %v816 = vand.u32 %v112, 4294901760
    %v817 = vsub.f32 %v112, %v816
    %v818 = vand.u32 %v817, 4294901760
    %819 = vmatprep.subr.mxu0 %v818
    %v820 = vand.u32 %v111, 4294901760
    %v821 = vsub.f32 %v111, %v820
    %v822 = vand.u32 %v821, 4294901760
    %823 = vmatpush1.msra.mxu0 %v822
    %v824 = vand.u32 %v110, 4294901760
    %v825 = vsub.f32 %v110, %v824
    %v826 = vand.u32 %v825, 4294901760
    %827 = vmatprep.subr.mxu0 %v826
    %v828 = vand.u32 %v109, 4294901760
    %v829 = vsub.f32 %v109, %v828
    %v830 = vand.u32 %v829, 4294901760
    %831 = vmatpush1.msra.mxu0 %v830
    %v832 = vand.u32 %v108, 4294901760
    %v833 = vsub.f32 %v108, %v832
    %v834 = vand.u32 %v833, 4294901760
    %835 = vmatprep.subr.mxu0 %v834
    %v836 = vand.u32 %v107, 4294901760
    %v837 = vsub.f32 %v107, %v836
    %v838 = vand.u32 %v837, 4294901760
    %839 = vmatpush1.msra.mxu0 %v838
    %840 = vmatprep.subr.mxu0 0.0
    %841 = vmatpush2.msra.mxu0 0.0
    %842 = vmatprep.subr.mxu0 0.0
    %843 = vmatpush2.msra.mxu0 0.0
    %844 = vmatprep.subr.mxu0 0.0
    %845 = vmatpush2.msra.mxu0 0.0
    %846 = vmatprep.subr.mxu0 0.0
    %847 = vmatpush2.msra.mxu0 0.0
    %848 = vmatprep.subr.mxu0 0.0
    %849 = vmatpush2.msra.mxu0 0.0
    %850 = vmatprep.subr.mxu0 0.0
    %851 = vmatpush2.msra.mxu0 0.0
    %852 = vmatprep.subr.mxu0 0.0
    %853 = vmatpush2.msra.mxu0 0.0
    %854 = vmatprep.subr.mxu0 0.0
    %855 = vmatpush2.msra.mxu0 0.0
    %856 = vmatprep.subr.mxu0 0.0
    %857 = vmatpush2.msra.mxu0 0.0
    %858 = vmatprep.subr.mxu0 0.0
    %859 = vmatpush2.msra.mxu0 0.0
    %860 = vmatprep.subr.mxu0 0.0
    %861 = vmatpush2.msra.mxu0 0.0
    %862 = vmatprep.subr.mxu0 0.0
    %863 = vmatpush2.msra.mxu0 0.0
    %864 = vmatprep.subr.mxu0 0.0
    %865 = vmatpush2.msra.mxu0 0.0
    %866 = vmatprep.subr.mxu0 0.0
    %867 = vmatpush2.msra.mxu0 0.0
    %868 = vmatprep.subr.mxu0 0.0
    %869 = vmatpush2.msra.mxu0 0.0
    %870 = vmatprep.subr.mxu0 0.0
    %871 = vmatpush2.msra.mxu0 0.0
    %872 = vmatprep.mubr.f32.mxu0 0.0
    %v873 = vand.u32 %v229, 4294901760
    %874 = vmatmul.mubr.f32.gmra.mxu0 %v873
    %v875 = vpop.f32.mrf.mxu0
    %v876 = vadd.f32 %v735, %v875
    %v877 = vpop.f32.mrf.mxu0
    %v878 = vadd.f32 %v737, %v877
    %879 = vmatprep.mubr.f32.mxu0 0.0
    %v880 = vand.u32 %v232, 4294901760
    %881 = vmatmul.mubr.f32.gmra.mxu0 %v880
    %v882 = vpop.f32.mrf.mxu0
    %v883 = vadd.f32 %v744, %v882
    %v884 = vpop.f32.mrf.mxu0
    %v885 = vadd.f32 %v746, %v884
    %886 = vmatprep.mubr.f32.mxu0 0.0
    %v887 = vand.u32 %v235, 4294901760
    %888 = vmatmul.mubr.f32.gmra.mxu0 %v887
    %v889 = vpop.f32.mrf.mxu0
    %v890 = vadd.f32 %v753, %v889
    %v891 = vpop.f32.mrf.mxu0
    %v892 = vadd.f32 %v755, %v891
    %893 = vmatprep.mubr.f32.mxu0 0.0
    %v894 = vand.u32 %v238, 4294901760
    %895 = vmatmul.mubr.f32.gmra.mxu0 %v894
    %v896 = vpop.f32.mrf.mxu0
    %v897 = vadd.f32 %v762, %v896
    %v898 = vpop.f32.mrf.mxu0
    %v899 = vadd.f32 %v764, %v898
    %900 = vdwg.mxu0
    %901 = vmatprep.subr.mxu0 0.0
    %902 = vmatpush1.msra.mxu0 0.0
    %903 = vmatprep.subr.mxu0 0.0
    %904 = vmatpush1.msra.mxu0 0.0
    %905 = vmatprep.subr.mxu0 0.0
    %906 = vmatpush1.msra.mxu0 0.0
    %907 = vmatprep.subr.mxu0 0.0
    %908 = vmatpush1.msra.mxu0 0.0
    %909 = vmatprep.subr.mxu0 0.0
    %910 = vmatpush1.msra.mxu0 0.0
    %911 = vmatprep.subr.mxu0 0.0
    %912 = vmatpush1.msra.mxu0 0.0
    %913 = vmatprep.subr.mxu0 0.0
    %914 = vmatpush1.msra.mxu0 0.0
    %915 = vmatprep.subr.mxu0 0.0
    %916 = vmatpush1.msra.mxu0 0.0
    %917 = vmatprep.subr.mxu0 0.0
    %918 = vmatpush1.msra.mxu0 0.0
    %v919 = vand.u32 %v120, 4294901760
    %920 = vmatprep.subr.mxu0 %v919
    %v921 = vand.u32 %v119, 4294901760
    %922 = vmatpush1.msra.mxu0 %v921
    %v923 = vand.u32 %v118, 4294901760
    %924 = vmatprep.subr.mxu0 %v923
    %v925 = vand.u32 %v117, 4294901760
    %926 = vmatpush1.msra.mxu0 %v925
    %v927 = vand.u32 %v116, 4294901760
    %928 = vmatprep.subr.mxu0 %v927
    %v929 = vand.u32 %v115, 4294901760
    %930 = vmatpush1.msra.mxu0 %v929
    %v931 = vand.u32 %v114, 4294901760
    %932 = vmatprep.subr.mxu0 %v931
    %v933 = vand.u32 %v113, 4294901760
    %934 = vmatpush1.msra.mxu0 %v933
    %v935 = vand.u32 %v112, 4294901760
    %936 = vmatprep.subr.mxu0 %v935
    %v937 = vand.u32 %v111, 4294901760
    %938 = vmatpush1.msra.mxu0 %v937
    %v939 = vand.u32 %v110, 4294901760
    %940 = vmatprep.subr.mxu0 %v939
    %v941 = vand.u32 %v109, 4294901760
    %942 = vmatpush1.msra.mxu0 %v941
    %v943 = vand.u32 %v108, 4294901760
    %944 = vmatprep.subr.mxu0 %v943
    %v945 = vand.u32 %v107, 4294901760
    %946 = vmatpush1.msra.mxu0 %v945
    %947 = vmatprep.subr.mxu0 0.0
    %948 = vmatpush2.msra.mxu0 0.0
    %949 = vmatprep.subr.mxu0 0.0
    %950 = vmatpush2.msra.mxu0 0.0
    %951 = vmatprep.subr.mxu0 0.0
    %952 = vmatpush2.msra.mxu0 0.0
    %953 = vmatprep.subr.mxu0 0.0
    %954 = vmatpush2.msra.mxu0 0.0
    %955 = vmatprep.subr.mxu0 0.0
    %956 = vmatpush2.msra.mxu0 0.0
    %957 = vmatprep.subr.mxu0 0.0
    %958 = vmatpush2.msra.mxu0 0.0
    %959 = vmatprep.subr.mxu0 0.0
    %960 = vmatpush2.msra.mxu0 0.0
    %961 = vmatprep.subr.mxu0 0.0
    %962 = vmatpush2.msra.mxu0 0.0
    %963 = vmatprep.subr.mxu0 0.0
    %964 = vmatpush2.msra.mxu0 0.0
    %965 = vmatprep.subr.mxu0 0.0
    %966 = vmatpush2.msra.mxu0 0.0
    %967 = vmatprep.subr.mxu0 0.0
    %968 = vmatpush2.msra.mxu0 0.0
    %969 = vmatprep.subr.mxu0 0.0
    %970 = vmatpush2.msra.mxu0 0.0
    %971 = vmatprep.subr.mxu0 0.0
    %972 = vmatpush2.msra.mxu0 0.0
    %973 = vmatprep.subr.mxu0 0.0
    %974 = vmatpush2.msra.mxu0 0.0
    %975 = vmatprep.subr.mxu0 0.0
    %976 = vmatpush2.msra.mxu0 0.0
    %977 = vmatprep.subr.mxu0 0.0
    %978 = vmatpush2.msra.mxu0 0.0
    %979 = vmatprep.mubr.f32.mxu0 0.0
    %v980 = vand.u32 %v229, 4294901760
    %981 = vmatmul.mubr.f32.gmra.mxu0 %v980
    %v982 = vpop.f32.mrf.mxu0
    %v983 = vadd.f32 %v876, %v982
    %v984 = vpop.f32.mrf.mxu0
    %v985 = vadd.f32 %v878, %v984
    %986 = vmatprep.mubr.f32.mxu0 0.0
    %v987 = vand.u32 %v232, 4294901760
    %988 = vmatmul.mubr.f32.gmra.mxu0 %v987
    %v989 = vpop.f32.mrf.mxu0
    %v990 = vadd.f32 %v883, %v989
    %v991 = vpop.f32.mrf.mxu0
    %v992 = vadd.f32 %v885, %v991
    %993 = vmatprep.mubr.f32.mxu0 0.0
    %v994 = vand.u32 %v235, 4294901760
    %995 = vmatmul.mubr.f32.gmra.mxu0 %v994
    %v996 = vpop.f32.mrf.mxu0
    %v997 = vadd.f32 %v890, %v996
    %v998 = vpop.f32.mrf.mxu0
    %v999 = vadd.f32 %v892, %v998
    %1000 = vmatprep.mubr.f32.mxu0 0.0
    %v1001 = vand.u32 %v238, 4294901760
    %1002 = vmatmul.mubr.f32.gmra.mxu0 %v1001
    %v1003 = vpop.f32.mrf.mxu0
    %v1004 = vadd.f32 %v897, %v1003
    %v1005 = vpop.f32.mrf.mxu0
    %v1006 = vadd.f32 %v899, %v1005
    %1007 = vdwg.mxu0
    %v1008 = vld [vmem:[#allocation7] sm:$0xff]
    %v1009 = vld [vmem:[#allocation7 + $0x8] sm:$0xff]
    %v1010 = vld [vmem:[#allocation7 + $0x10] sm:$0xff]
    %v1011 = vld [vmem:[#allocation7 + $0x18] sm:$0xff]
    %v1013 = vsel %vm227, %v1008, 0
    %v1016 = vsel %vm227, %v1009, 0
    %v1019 = vsel %vm227, %v1010, 0
    %v1022 = vsel %vm227, %v1011, 0
    %1024 = vmatprep.subr.mxu0 0.0
    %1025 = vmatpush1.msra.mxu0 0.0
    %1026 = vmatprep.subr.mxu0 0.0
    %1027 = vmatpush1.msra.mxu0 0.0
    %1028 = vmatprep.subr.mxu0 0.0
    %1029 = vmatpush1.msra.mxu0 0.0
    %1030 = vmatprep.subr.mxu0 0.0
    %1031 = vmatpush1.msra.mxu0 0.0
    %1032 = vmatprep.subr.mxu0 0.0
    %1033 = vmatpush1.msra.mxu0 0.0
    %1034 = vmatprep.subr.mxu0 0.0
    %1035 = vmatpush1.msra.mxu0 0.0
    %1036 = vmatprep.subr.mxu0 0.0
    %1037 = vmatpush1.msra.mxu0 0.0
    %1038 = vmatprep.subr.mxu0 0.0
    %1039 = vmatpush1.msra.mxu0 0.0
    %1040 = vmatprep.subr.mxu0 0.0
    %1041 = vmatpush1.msra.mxu0 0.0
    %v1042 = vand.u32 %v222, 4294901760
    %1043 = vmatprep.subr.mxu0 %v1042
    %v1044 = vand.u32 %v221, 4294901760
    %1045 = vmatpush1.msra.mxu0 %v1044
    %v1046 = vand.u32 %v220, 4294901760
    %1047 = vmatprep.subr.mxu0 %v1046
    %v1048 = vand.u32 %v219, 4294901760
    %1049 = vmatpush1.msra.mxu0 %v1048
    %v1050 = vand.u32 %v218, 4294901760
    %1051 = vmatprep.subr.mxu0 %v1050
    %v1052 = vand.u32 %v217, 4294901760
    %1053 = vmatpush1.msra.mxu0 %v1052
    %v1054 = vand.u32 %v216, 4294901760
    %1055 = vmatprep.subr.mxu0 %v1054
    %v1056 = vand.u32 %v215, 4294901760
    %1057 = vmatpush1.msra.mxu0 %v1056
    %v1058 = vand.u32 %v214, 4294901760
    %1059 = vmatprep.subr.mxu0 %v1058
    %v1060 = vand.u32 %v213, 4294901760
    %1061 = vmatpush1.msra.mxu0 %v1060
    %v1062 = vand.u32 %v212, 4294901760
    %1063 = vmatprep.subr.mxu0 %v1062
    %v1064 = vand.u32 %v211, 4294901760
    %1065 = vmatpush1.msra.mxu0 %v1064
    %v1066 = vand.u32 %v210, 4294901760
    %1067 = vmatprep.subr.mxu0 %v1066
    %v1068 = vand.u32 %v209, 4294901760
    %1069 = vmatpush1.msra.mxu0 %v1068
    %1070 = vmatprep.subr.mxu0 0.0
    %1071 = vmatpush2.msra.mxu0 0.0
    %1072 = vmatprep.subr.mxu0 0.0
    %1073 = vmatpush2.msra.mxu0 0.0
    %1074 = vmatprep.subr.mxu0 0.0
    %1075 = vmatpush2.msra.mxu0 0.0
    %1076 = vmatprep.subr.mxu0 0.0
    %1077 = vmatpush2.msra.mxu0 0.0
    %1078 = vmatprep.subr.mxu0 0.0
    %1079 = vmatpush2.msra.mxu0 0.0
    %1080 = vmatprep.subr.mxu0 0.0
    %1081 = vmatpush2.msra.mxu0 0.0
    %1082 = vmatprep.subr.mxu0 0.0
    %1083 = vmatpush2.msra.mxu0 0.0
    %1084 = vmatprep.subr.mxu0 0.0
    %1085 = vmatpush2.msra.mxu0 0.0
    %1086 = vmatprep.subr.mxu0 0.0
    %1087 = vmatpush2.msra.mxu0 0.0
    %1088 = vmatprep.subr.mxu0 0.0
    %1089 = vmatpush2.msra.mxu0 0.0
    %1090 = vmatprep.subr.mxu0 0.0
    %1091 = vmatpush2.msra.mxu0 0.0
    %1092 = vmatprep.subr.mxu0 0.0
    %1093 = vmatpush2.msra.mxu0 0.0
    %1094 = vmatprep.subr.mxu0 0.0
    %1095 = vmatpush2.msra.mxu0 0.0
    %1096 = vmatprep.subr.mxu0 0.0
    %1097 = vmatpush2.msra.mxu0 0.0
    %1098 = vmatprep.subr.mxu0 0.0
    %1099 = vmatpush2.msra.mxu0 0.0
    %1100 = vmatprep.subr.mxu0 0.0
    %1101 = vmatpush2.msra.mxu0 0.0
    %1102 = vmatprep.mubr.f32.mxu0 0.0
    %v1103 = vand.u32 %v1013, 4294901760
    %v1104 = vsub.f32 %v1013, %v1103
    %v1105 = vand.u32 %v1104, 4294901760
    %v1106 = vsub.f32 %v1104, %v1105
    %v1107 = vand.u32 %v1106, 4294901760
    %1108 = vmatmul.mubr.f32.gmra.mxu0 %v1107
    %v1109 = vpop.f32.mrf.mxu0
    %v1110 = vadd.f32 0.0, %v1109
    %v1111 = vpop.f32.mrf.mxu0
    %v1112 = vadd.f32 0.0, %v1111
    %1113 = vmatprep.mubr.f32.mxu0 0.0
    %v1114 = vand.u32 %v1016, 4294901760
    %v1115 = vsub.f32 %v1016, %v1114
    %v1116 = vand.u32 %v1115, 4294901760
    %v1117 = vsub.f32 %v1115, %v1116
    %v1118 = vand.u32 %v1117, 4294901760
    %1119 = vmatmul.mubr.f32.gmra.mxu0 %v1118
    %v1120 = vpop.f32.mrf.mxu0
    %v1121 = vadd.f32 0.0, %v1120
    %v1122 = vpop.f32.mrf.mxu0
    %v1123 = vadd.f32 0.0, %v1122
    %1124 = vmatprep.mubr.f32.mxu0 0.0
    %v1125 = vand.u32 %v1019, 4294901760
    %v1126 = vsub.f32 %v1019, %v1125
    %v1127 = vand.u32 %v1126, 4294901760
    %v1128 = vsub.f32 %v1126, %v1127
    %v1129 = vand.u32 %v1128, 4294901760
    %1130 = vmatmul.mubr.f32.gmra.mxu0 %v1129
    %v1131 = vpop.f32.mrf.mxu0
    %v1132 = vadd.f32 0.0, %v1131
    %v1133 = vpop.f32.mrf.mxu0
    %v1134 = vadd.f32 0.0, %v1133
    %1135 = vmatprep.mubr.f32.mxu0 0.0
    %v1136 = vand.u32 %v1022, 4294901760
    %v1137 = vsub.f32 %v1022, %v1136
    %v1138 = vand.u32 %v1137, 4294901760
    %v1139 = vsub.f32 %v1137, %v1138
    %v1140 = vand.u32 %v1139, 4294901760
    %1141 = vmatmul.mubr.f32.gmra.mxu0 %v1140
    %v1142 = vpop.f32.mrf.mxu0
    %v1143 = vadd.f32 0.0, %v1142
    %v1144 = vpop.f32.mrf.mxu0
    %v1145 = vadd.f32 0.0, %v1144
    %1146 = vdwg.mxu0
    %1147 = vmatprep.subr.mxu0 0.0
    %1148 = vmatpush1.msra.mxu0 0.0
    %1149 = vmatprep.subr.mxu0 0.0
    %1150 = vmatpush1.msra.mxu0 0.0
    %1151 = vmatprep.subr.mxu0 0.0
    %1152 = vmatpush1.msra.mxu0 0.0
    %1153 = vmatprep.subr.mxu0 0.0
    %1154 = vmatpush1.msra.mxu0 0.0
    %1155 = vmatprep.subr.mxu0 0.0
    %1156 = vmatpush1.msra.mxu0 0.0
    %1157 = vmatprep.subr.mxu0 0.0
    %1158 = vmatpush1.msra.mxu0 0.0
    %1159 = vmatprep.subr.mxu0 0.0
    %1160 = vmatpush1.msra.mxu0 0.0
    %1161 = vmatprep.subr.mxu0 0.0
    %1162 = vmatpush1.msra.mxu0 0.0
    %1163 = vmatprep.subr.mxu0 0.0
    %1164 = vmatpush1.msra.mxu0 0.0
    %v1165 = vand.u32 %v222, 4294901760
    %v1166 = vsub.f32 %v222, %v1165
    %v1167 = vand.u32 %v1166, 4294901760
    %v1168 = vsub.f32 %v1166, %v1167
    %v1169 = vand.u32 %v1168, 4294901760
    %1170 = vmatprep.subr.mxu0 %v1169
    %v1171 = vand.u32 %v221, 4294901760
    %v1172 = vsub.f32 %v221, %v1171
    %v1173 = vand.u32 %v1172, 4294901760
    %v1174 = vsub.f32 %v1172, %v1173
    %v1175 = vand.u32 %v1174, 4294901760
    %1176 = vmatpush1.msra.mxu0 %v1175
    %v1177 = vand.u32 %v220, 4294901760
    %v1178 = vsub.f32 %v220, %v1177
    %v1179 = vand.u32 %v1178, 4294901760
    %v1180 = vsub.f32 %v1178, %v1179
    %v1181 = vand.u32 %v1180, 4294901760
    %1182 = vmatprep.subr.mxu0 %v1181
    %v1183 = vand.u32 %v219, 4294901760
    %v1184 = vsub.f32 %v219, %v1183
    %v1185 = vand.u32 %v1184, 4294901760
    %v1186 = vsub.f32 %v1184, %v1185
    %v1187 = vand.u32 %v1186, 4294901760
    %1188 = vmatpush1.msra.mxu0 %v1187
    %v1189 = vand.u32 %v218, 4294901760
    %v1190 = vsub.f32 %v218, %v1189
    %v1191 = vand.u32 %v1190, 4294901760
    %v1192 = vsub.f32 %v1190, %v1191
    %v1193 = vand.u32 %v1192, 4294901760
    %1194 = vmatprep.subr.mxu0 %v1193
    %v1195 = vand.u32 %v217, 4294901760
    %v1196 = vsub.f32 %v217, %v1195
    %v1197 = vand.u32 %v1196, 4294901760
    %v1198 = vsub.f32 %v1196, %v1197
    %v1199 = vand.u32 %v1198, 4294901760
    %1200 = vmatpush1.msra.mxu0 %v1199
    %v1201 = vand.u32 %v216, 4294901760
    %v1202 = vsub.f32 %v216, %v1201
    %v1203 = vand.u32 %v1202, 4294901760
    %v1204 = vsub.f32 %v1202, %v1203
    %v1205 = vand.u32 %v1204, 4294901760
    %1206 = vmatprep.subr.mxu0 %v1205
    %v1207 = vand.u32 %v215, 4294901760
    %v1208 = vsub.f32 %v215, %v1207
    %v1209 = vand.u32 %v1208, 4294901760
    %v1210 = vsub.f32 %v1208, %v1209
    %v1211 = vand.u32 %v1210, 4294901760
    %1212 = vmatpush1.msra.mxu0 %v1211
    %v1213 = vand.u32 %v214, 4294901760
    %v1214 = vsub.f32 %v214, %v1213
    %v1215 = vand.u32 %v1214, 4294901760
    %v1216 = vsub.f32 %v1214, %v1215
    %v1217 = vand.u32 %v1216, 4294901760
    %1218 = vmatprep.subr.mxu0 %v1217
    %v1219 = vand.u32 %v213, 4294901760
    %v1220 = vsub.f32 %v213, %v1219
    %v1221 = vand.u32 %v1220, 4294901760
    %v1222 = vsub.f32 %v1220, %v1221
    %v1223 = vand.u32 %v1222, 4294901760
    %1224 = vmatpush1.msra.mxu0 %v1223
    %v1225 = vand.u32 %v212, 4294901760
    %v1226 = vsub.f32 %v212, %v1225
    %v1227 = vand.u32 %v1226, 4294901760
    %v1228 = vsub.f32 %v1226, %v1227
    %v1229 = vand.u32 %v1228, 4294901760
    %1230 = vmatprep.subr.mxu0 %v1229
    %v1231 = vand.u32 %v211, 4294901760
    %v1232 = vsub.f32 %v211, %v1231
    %v1233 = vand.u32 %v1232, 4294901760
    %v1234 = vsub.f32 %v1232, %v1233
    %v1235 = vand.u32 %v1234, 4294901760
    %1236 = vmatpush1.msra.mxu0 %v1235
    %v1237 = vand.u32 %v210, 4294901760
    %v1238 = vsub.f32 %v210, %v1237
    %v1239 = vand.u32 %v1238, 4294901760
    %v1240 = vsub.f32 %v1238, %v1239
    %v1241 = vand.u32 %v1240, 4294901760
    %1242 = vmatprep.subr.mxu0 %v1241
    %v1243 = vand.u32 %v209, 4294901760
    %v1244 = vsub.f32 %v209, %v1243
    %v1245 = vand.u32 %v1244, 4294901760
    %v1246 = vsub.f32 %v1244, %v1245
    %v1247 = vand.u32 %v1246, 4294901760
    %1248 = vmatpush1.msra.mxu0 %v1247
    %1249 = vmatprep.subr.mxu0 0.0
    %1250 = vmatpush2.msra.mxu0 0.0
    %1251 = vmatprep.subr.mxu0 0.0
    %1252 = vmatpush2.msra.mxu0 0.0
    %1253 = vmatprep.subr.mxu0 0.0
    %1254 = vmatpush2.msra.mxu0 0.0
    %1255 = vmatprep.subr.mxu0 0.0
    %1256 = vmatpush2.msra.mxu0 0.0
    %1257 = vmatprep.subr.mxu0 0.0
    %1258 = vmatpush2.msra.mxu0 0.0
    %1259 = vmatprep.subr.mxu0 0.0
    %1260 = vmatpush2.msra.mxu0 0.0
    %1261 = vmatprep.subr.mxu0 0.0
    %1262 = vmatpush2.msra.mxu0 0.0
    %1263 = vmatprep.subr.mxu0 0.0
    %1264 = vmatpush2.msra.mxu0 0.0
    %1265 = vmatprep.subr.mxu0 0.0
    %1266 = vmatpush2.msra.mxu0 0.0
    %1267 = vmatprep.subr.mxu0 0.0
    %1268 = vmatpush2.msra.mxu0 0.0
    %1269 = vmatprep.subr.mxu0 0.0
    %1270 = vmatpush2.msra.mxu0 0.0
    %1271 = vmatprep.subr.mxu0 0.0
    %1272 = vmatpush2.msra.mxu0 0.0
    %1273 = vmatprep.subr.mxu0 0.0
    %1274 = vmatpush2.msra.mxu0 0.0
    %1275 = vmatprep.subr.mxu0 0.0
    %1276 = vmatpush2.msra.mxu0 0.0
    %1277 = vmatprep.subr.mxu0 0.0
    %1278 = vmatpush2.msra.mxu0 0.0
    %1279 = vmatprep.subr.mxu0 0.0
    %1280 = vmatpush2.msra.mxu0 0.0
    %1281 = vmatprep.mubr.f32.mxu0 0.0
    %v1282 = vand.u32 %v1013, 4294901760
    %1283 = vmatmul.mubr.f32.gmra.mxu0 %v1282
    %v1284 = vpop.f32.mrf.mxu0
    %v1285 = vadd.f32 %v1110, %v1284
    %v1286 = vpop.f32.mrf.mxu0
    %v1287 = vadd.f32 %v1112, %v1286
    %1288 = vmatprep.mubr.f32.mxu0 0.0
    %v1289 = vand.u32 %v1016, 4294901760
    %1290 = vmatmul.mubr.f32.gmra.mxu0 %v1289
    %v1291 = vpop.f32.mrf.mxu0
    %v1292 = vadd.f32 %v1121, %v1291
    %v1293 = vpop.f32.mrf.mxu0
    %v1294 = vadd.f32 %v1123, %v1293
    %1295 = vmatprep.mubr.f32.mxu0 0.0
    %v1296 = vand.u32 %v1019, 4294901760
    %1297 = vmatmul.mubr.f32.gmra.mxu0 %v1296
    %v1298 = vpop.f32.mrf.mxu0
    %v1299 = vadd.f32 %v1132, %v1298
    %v1300 = vpop.f32.mrf.mxu0
    %v1301 = vadd.f32 %v1134, %v1300
    %1302 = vmatprep.mubr.f32.mxu0 0.0
    %v1303 = vand.u32 %v1022, 4294901760
    %1304 = vmatmul.mubr.f32.gmra.mxu0 %v1303
    %v1305 = vpop.f32.mrf.mxu0
    %v1306 = vadd.f32 %v1143, %v1305
    %v1307 = vpop.f32.mrf.mxu0
    %v1308 = vadd.f32 %v1145, %v1307
    %1309 = vdwg.mxu0
    %1310 = vmatprep.subr.mxu0 0.0
    %1311 = vmatpush1.msra.mxu0 0.0
    %1312 = vmatprep.subr.mxu0 0.0
    %1313 = vmatpush1.msra.mxu0 0.0
    %1314 = vmatprep.subr.mxu0 0.0
    %1315 = vmatpush1.msra.mxu0 0.0
    %1316 = vmatprep.subr.mxu0 0.0
    %1317 = vmatpush1.msra.mxu0 0.0
    %1318 = vmatprep.subr.mxu0 0.0
    %1319 = vmatpush1.msra.mxu0 0.0
    %1320 = vmatprep.subr.mxu0 0.0
    %1321 = vmatpush1.msra.mxu0 0.0
    %1322 = vmatprep.subr.mxu0 0.0
    %1323 = vmatpush1.msra.mxu0 0.0
    %1324 = vmatprep.subr.mxu0 0.0
    %1325 = vmatpush1.msra.mxu0 0.0
    %1326 = vmatprep.subr.mxu0 0.0
    %1327 = vmatpush1.msra.mxu0 0.0
    %v1328 = vand.u32 %v222, 4294901760
    %v1329 = vsub.f32 %v222, %v1328
    %1330 = vmatprep.subr.mxu0 %v1329
    %v1331 = vand.u32 %v221, 4294901760
    %v1332 = vsub.f32 %v221, %v1331
    %1333 = vmatpush1.msra.mxu0 %v1332
    %v1334 = vand.u32 %v220, 4294901760
    %v1335 = vsub.f32 %v220, %v1334
    %1336 = vmatprep.subr.mxu0 %v1335
    %v1337 = vand.u32 %v219, 4294901760
    %v1338 = vsub.f32 %v219, %v1337
    %1339 = vmatpush1.msra.mxu0 %v1338
    %v1340 = vand.u32 %v218, 4294901760
    %v1341 = vsub.f32 %v218, %v1340
    %1342 = vmatprep.subr.mxu0 %v1341
    %v1343 = vand.u32 %v217, 4294901760
    %v1344 = vsub.f32 %v217, %v1343
    %1345 = vmatpush1.msra.mxu0 %v1344
    %v1346 = vand.u32 %v216, 4294901760
    %v1347 = vsub.f32 %v216, %v1346
    %1348 = vmatprep.subr.mxu0 %v1347
    %v1349 = vand.u32 %v215, 4294901760
    %v1350 = vsub.f32 %v215, %v1349
    %1351 = vmatpush1.msra.mxu0 %v1350
    %v1352 = vand.u32 %v214, 4294901760
    %v1353 = vsub.f32 %v214, %v1352
    %1354 = vmatprep.subr.mxu0 %v1353
    %v1355 = vand.u32 %v213, 4294901760
    %v1356 = vsub.f32 %v213, %v1355
    %1357 = vmatpush1.msra.mxu0 %v1356
    %v1358 = vand.u32 %v212, 4294901760
    %v1359 = vsub.f32 %v212, %v1358
    %1360 = vmatprep.subr.mxu0 %v1359
    %v1361 = vand.u32 %v211, 4294901760
    %v1362 = vsub.f32 %v211, %v1361
    %1363 = vmatpush1.msra.mxu0 %v1362
    %v1364 = vand.u32 %v210, 4294901760
    %v1365 = vsub.f32 %v210, %v1364
    %1366 = vmatprep.subr.mxu0 %v1365
    %v1367 = vand.u32 %v209, 4294901760
    %v1368 = vsub.f32 %v209, %v1367
    %1369 = vmatpush1.msra.mxu0 %v1368
    %1370 = vmatprep.subr.mxu0 0.0
    %1371 = vmatpush2.msra.mxu0 0.0
    %1372 = vmatprep.subr.mxu0 0.0
    %1373 = vmatpush2.msra.mxu0 0.0
    %1374 = vmatprep.subr.mxu0 0.0
    %1375 = vmatpush2.msra.mxu0 0.0
    %1376 = vmatprep.subr.mxu0 0.0
    %1377 = vmatpush2.msra.mxu0 0.0
    %1378 = vmatprep.subr.mxu0 0.0
    %1379 = vmatpush2.msra.mxu0 0.0
    %1380 = vmatprep.subr.mxu0 0.0
    %1381 = vmatpush2.msra.mxu0 0.0
    %1382 = vmatprep.subr.mxu0 0.0
    %1383 = vmatpush2.msra.mxu0 0.0
    %1384 = vmatprep.subr.mxu0 0.0
    %1385 = vmatpush2.msra.mxu0 0.0
    %1386 = vmatprep.subr.mxu0 0.0
    %1387 = vmatpush2.msra.mxu0 0.0
    %1388 = vmatprep.subr.mxu0 0.0
    %1389 = vmatpush2.msra.mxu0 0.0
    %1390 = vmatprep.subr.mxu0 0.0
    %1391 = vmatpush2.msra.mxu0 0.0
    %1392 = vmatprep.subr.mxu0 0.0
    %1393 = vmatpush2.msra.mxu0 0.0
    %1394 = vmatprep.subr.mxu0 0.0
    %1395 = vmatpush2.msra.mxu0 0.0
    %1396 = vmatprep.subr.mxu0 0.0
    %1397 = vmatpush2.msra.mxu0 0.0
    %1398 = vmatprep.subr.mxu0 0.0
    %1399 = vmatpush2.msra.mxu0 0.0
    %1400 = vmatprep.subr.mxu0 0.0
    %1401 = vmatpush2.msra.mxu0 0.0
    %1402 = vmatprep.mubr.f32.mxu0 0.0
    %v1403 = vand.u32 %v1013, 4294901760
    %v1404 = vsub.f32 %v1013, %v1403
    %1405 = vmatmul.mubr.f32.gmra.mxu0 %v1404
    %v1406 = vpop.f32.mrf.mxu0
    %v1407 = vadd.f32 %v1285, %v1406
    %v1408 = vpop.f32.mrf.mxu0
    %v1409 = vadd.f32 %v1287, %v1408
    %1410 = vmatprep.mubr.f32.mxu0 0.0
    %v1411 = vand.u32 %v1016, 4294901760
    %v1412 = vsub.f32 %v1016, %v1411
    %1413 = vmatmul.mubr.f32.gmra.mxu0 %v1412
    %v1414 = vpop.f32.mrf.mxu0
    %v1415 = vadd.f32 %v1292, %v1414
    %v1416 = vpop.f32.mrf.mxu0
    %v1417 = vadd.f32 %v1294, %v1416
    %1418 = vmatprep.mubr.f32.mxu0 0.0
    %v1419 = vand.u32 %v1019, 4294901760
    %v1420 = vsub.f32 %v1019, %v1419
    %1421 = vmatmul.mubr.f32.gmra.mxu0 %v1420
    %v1422 = vpop.f32.mrf.mxu0
    %v1423 = vadd.f32 %v1299, %v1422
    %v1424 = vpop.f32.mrf.mxu0
    %v1425 = vadd.f32 %v1301, %v1424
    %1426 = vmatprep.mubr.f32.mxu0 0.0
    %v1427 = vand.u32 %v1022, 4294901760
    %v1428 = vsub.f32 %v1022, %v1427
    %1429 = vmatmul.mubr.f32.gmra.mxu0 %v1428
    %v1430 = vpop.f32.mrf.mxu0
    %v1431 = vadd.f32 %v1306, %v1430
    %v1432 = vpop.f32.mrf.mxu0
    %v1433 = vadd.f32 %v1308, %v1432
    %1434 = vdwg.mxu0
    %1435 = vmatprep.subr.mxu0 0.0
    %1436 = vmatpush1.msra.mxu0 0.0
    %1437 = vmatprep.subr.mxu0 0.0
    %1438 = vmatpush1.msra.mxu0 0.0
    %1439 = vmatprep.subr.mxu0 0.0
    %1440 = vmatpush1.msra.mxu0 0.0
    %1441 = vmatprep.subr.mxu0 0.0
    %1442 = vmatpush1.msra.mxu0 0.0
    %1443 = vmatprep.subr.mxu0 0.0
    %1444 = vmatpush1.msra.mxu0 0.0
    %1445 = vmatprep.subr.mxu0 0.0
    %1446 = vmatpush1.msra.mxu0 0.0
    %1447 = vmatprep.subr.mxu0 0.0
    %1448 = vmatpush1.msra.mxu0 0.0
    %1449 = vmatprep.subr.mxu0 0.0
    %1450 = vmatpush1.msra.mxu0 0.0
    %1451 = vmatprep.subr.mxu0 0.0
    %1452 = vmatpush1.msra.mxu0 0.0
    %v1453 = vand.u32 %v222, 4294901760
    %1454 = vmatprep.subr.mxu0 %v1453
    %v1455 = vand.u32 %v221, 4294901760
    %1456 = vmatpush1.msra.mxu0 %v1455
    %v1457 = vand.u32 %v220, 4294901760
    %1458 = vmatprep.subr.mxu0 %v1457
    %v1459 = vand.u32 %v219, 4294901760
    %1460 = vmatpush1.msra.mxu0 %v1459
    %v1461 = vand.u32 %v218, 4294901760
    %1462 = vmatprep.subr.mxu0 %v1461
    %v1463 = vand.u32 %v217, 4294901760
    %1464 = vmatpush1.msra.mxu0 %v1463
    %v1465 = vand.u32 %v216, 4294901760
    %1466 = vmatprep.subr.mxu0 %v1465
    %v1467 = vand.u32 %v215, 4294901760
    %1468 = vmatpush1.msra.mxu0 %v1467
    %v1469 = vand.u32 %v214, 4294901760
    %1470 = vmatprep.subr.mxu0 %v1469
    %v1471 = vand.u32 %v213, 4294901760
    %1472 = vmatpush1.msra.mxu0 %v1471
    %v1473 = vand.u32 %v212, 4294901760
    %1474 = vmatprep.subr.mxu0 %v1473
    %v1475 = vand.u32 %v211, 4294901760
    %1476 = vmatpush1.msra.mxu0 %v1475
    %v1477 = vand.u32 %v210, 4294901760
    %1478 = vmatprep.subr.mxu0 %v1477
    %v1479 = vand.u32 %v209, 4294901760
    %1480 = vmatpush1.msra.mxu0 %v1479
    %1481 = vmatprep.subr.mxu0 0.0
    %1482 = vmatpush2.msra.mxu0 0.0
    %1483 = vmatprep.subr.mxu0 0.0
    %1484 = vmatpush2.msra.mxu0 0.0
    %1485 = vmatprep.subr.mxu0 0.0
    %1486 = vmatpush2.msra.mxu0 0.0
    %1487 = vmatprep.subr.mxu0 0.0
    %1488 = vmatpush2.msra.mxu0 0.0
    %1489 = vmatprep.subr.mxu0 0.0
    %1490 = vmatpush2.msra.mxu0 0.0
    %1491 = vmatprep.subr.mxu0 0.0
    %1492 = vmatpush2.msra.mxu0 0.0
    %1493 = vmatprep.subr.mxu0 0.0
    %1494 = vmatpush2.msra.mxu0 0.0
    %1495 = vmatprep.subr.mxu0 0.0
    %1496 = vmatpush2.msra.mxu0 0.0
    %1497 = vmatprep.subr.mxu0 0.0
    %1498 = vmatpush2.msra.mxu0 0.0
    %1499 = vmatprep.subr.mxu0 0.0
    %1500 = vmatpush2.msra.mxu0 0.0
    %1501 = vmatprep.subr.mxu0 0.0
    %1502 = vmatpush2.msra.mxu0 0.0
    %1503 = vmatprep.subr.mxu0 0.0
    %1504 = vmatpush2.msra.mxu0 0.0
    %1505 = vmatprep.subr.mxu0 0.0
    %1506 = vmatpush2.msra.mxu0 0.0
    %1507 = vmatprep.subr.mxu0 0.0
    %1508 = vmatpush2.msra.mxu0 0.0
    %1509 = vmatprep.subr.mxu0 0.0
    %1510 = vmatpush2.msra.mxu0 0.0
    %1511 = vmatprep.subr.mxu0 0.0
    %1512 = vmatpush2.msra.mxu0 0.0
    %1513 = vmatprep.mubr.f32.mxu0 0.0
    %v1514 = vand.u32 %v1013, 4294901760
    %v1515 = vsub.f32 %v1013, %v1514
    %v1516 = vand.u32 %v1515, 4294901760
    %1517 = vmatmul.mubr.f32.gmra.mxu0 %v1516
    %v1518 = vpop.f32.mrf.mxu0
    %v1519 = vadd.f32 %v1407, %v1518
    %v1520 = vpop.f32.mrf.mxu0
    %v1521 = vadd.f32 %v1409, %v1520
    %1522 = vmatprep.mubr.f32.mxu0 0.0
    %v1523 = vand.u32 %v1016, 4294901760
    %v1524 = vsub.f32 %v1016, %v1523
    %v1525 = vand.u32 %v1524, 4294901760
    %1526 = vmatmul.mubr.f32.gmra.mxu0 %v1525
    %v1527 = vpop.f32.mrf.mxu0
    %v1528 = vadd.f32 %v1415, %v1527
    %v1529 = vpop.f32.mrf.mxu0
    %v1530 = vadd.f32 %v1417, %v1529
    %1531 = vmatprep.mubr.f32.mxu0 0.0
    %v1532 = vand.u32 %v1019, 4294901760
    %v1533 = vsub.f32 %v1019, %v1532
    %v1534 = vand.u32 %v1533, 4294901760
    %1535 = vmatmul.mubr.f32.gmra.mxu0 %v1534
    %v1536 = vpop.f32.mrf.mxu0
    %v1537 = vadd.f32 %v1423, %v1536
    %v1538 = vpop.f32.mrf.mxu0
    %v1539 = vadd.f32 %v1425, %v1538
    %1540 = vmatprep.mubr.f32.mxu0 0.0
    %v1541 = vand.u32 %v1022, 4294901760
    %v1542 = vsub.f32 %v1022, %v1541
    %v1543 = vand.u32 %v1542, 4294901760
    %1544 = vmatmul.mubr.f32.gmra.mxu0 %v1543
    %v1545 = vpop.f32.mrf.mxu0
    %v1546 = vadd.f32 %v1431, %v1545
    %v1547 = vpop.f32.mrf.mxu0
    %v1548 = vadd.f32 %v1433, %v1547
    %1549 = vdwg.mxu0
    %1550 = vmatprep.subr.mxu0 0.0
    %1551 = vmatpush1.msra.mxu0 0.0
    %1552 = vmatprep.subr.mxu0 0.0
    %1553 = vmatpush1.msra.mxu0 0.0
    %1554 = vmatprep.subr.mxu0 0.0
    %1555 = vmatpush1.msra.mxu0 0.0
    %1556 = vmatprep.subr.mxu0 0.0
    %1557 = vmatpush1.msra.mxu0 0.0
    %1558 = vmatprep.subr.mxu0 0.0
    %1559 = vmatpush1.msra.mxu0 0.0
    %1560 = vmatprep.subr.mxu0 0.0
    %1561 = vmatpush1.msra.mxu0 0.0
    %1562 = vmatprep.subr.mxu0 0.0
    %1563 = vmatpush1.msra.mxu0 0.0
    %1564 = vmatprep.subr.mxu0 0.0
    %1565 = vmatpush1.msra.mxu0 0.0
    %1566 = vmatprep.subr.mxu0 0.0
    %1567 = vmatpush1.msra.mxu0 0.0
    %v1568 = vand.u32 %v222, 4294901760
    %v1569 = vsub.f32 %v222, %v1568
    %v1570 = vand.u32 %v1569, 4294901760
    %1571 = vmatprep.subr.mxu0 %v1570
    %v1572 = vand.u32 %v221, 4294901760
    %v1573 = vsub.f32 %v221, %v1572
    %v1574 = vand.u32 %v1573, 4294901760
    %1575 = vmatpush1.msra.mxu0 %v1574
    %v1576 = vand.u32 %v220, 4294901760
    %v1577 = vsub.f32 %v220, %v1576
    %v1578 = vand.u32 %v1577, 4294901760
    %1579 = vmatprep.subr.mxu0 %v1578
    %v1580 = vand.u32 %v219, 4294901760
    %v1581 = vsub.f32 %v219, %v1580
    %v1582 = vand.u32 %v1581, 4294901760
    %1583 = vmatpush1.msra.mxu0 %v1582
    %v1584 = vand.u32 %v218, 4294901760
    %v1585 = vsub.f32 %v218, %v1584
    %v1586 = vand.u32 %v1585, 4294901760
    %1587 = vmatprep.subr.mxu0 %v1586
    %v1588 = vand.u32 %v217, 4294901760
    %v1589 = vsub.f32 %v217, %v1588
    %v1590 = vand.u32 %v1589, 4294901760
    %1591 = vmatpush1.msra.mxu0 %v1590
    %v1592 = vand.u32 %v216, 4294901760
    %v1593 = vsub.f32 %v216, %v1592
    %v1594 = vand.u32 %v1593, 4294901760
    %1595 = vmatprep.subr.mxu0 %v1594
    %v1596 = vand.u32 %v215, 4294901760
    %v1597 = vsub.f32 %v215, %v1596
    %v1598 = vand.u32 %v1597, 4294901760
    %1599 = vmatpush1.msra.mxu0 %v1598
    %v1600 = vand.u32 %v214, 4294901760
    %v1601 = vsub.f32 %v214, %v1600
    %v1602 = vand.u32 %v1601, 4294901760
    %1603 = vmatprep.subr.mxu0 %v1602
    %v1604 = vand.u32 %v213, 4294901760
    %v1605 = vsub.f32 %v213, %v1604
    %v1606 = vand.u32 %v1605, 4294901760
    %1607 = vmatpush1.msra.mxu0 %v1606
    %v1608 = vand.u32 %v212, 4294901760
    %v1609 = vsub.f32 %v212, %v1608
    %v1610 = vand.u32 %v1609, 4294901760
    %1611 = vmatprep.subr.mxu0 %v1610
    %v1612 = vand.u32 %v211, 4294901760
    %v1613 = vsub.f32 %v211, %v1612
    %v1614 = vand.u32 %v1613, 4294901760
    %1615 = vmatpush1.msra.mxu0 %v1614
    %v1616 = vand.u32 %v210, 4294901760
    %v1617 = vsub.f32 %v210, %v1616
    %v1618 = vand.u32 %v1617, 4294901760
    %1619 = vmatprep.subr.mxu0 %v1618
    %v1620 = vand.u32 %v209, 4294901760
    %v1621 = vsub.f32 %v209, %v1620
    %v1622 = vand.u32 %v1621, 4294901760
    %1623 = vmatpush1.msra.mxu0 %v1622
    %1624 = vmatprep.subr.mxu0 0.0
    %1625 = vmatpush2.msra.mxu0 0.0
    %1626 = vmatprep.subr.mxu0 0.0
    %1627 = vmatpush2.msra.mxu0 0.0
    %1628 = vmatprep.subr.mxu0 0.0
    %1629 = vmatpush2.msra.mxu0 0.0
    %1630 = vmatprep.subr.mxu0 0.0
    %1631 = vmatpush2.msra.mxu0 0.0
    %1632 = vmatprep.subr.mxu0 0.0
    %1633 = vmatpush2.msra.mxu0 0.0
    %1634 = vmatprep.subr.mxu0 0.0
    %1635 = vmatpush2.msra.mxu0 0.0
    %1636 = vmatprep.subr.mxu0 0.0
    %1637 = vmatpush2.msra.mxu0 0.0
    %1638 = vmatprep.subr.mxu0 0.0
    %1639 = vmatpush2.msra.mxu0 0.0
    %1640 = vmatprep.subr.mxu0 0.0
    %1641 = vmatpush2.msra.mxu0 0.0
    %1642 = vmatprep.subr.mxu0 0.0
    %1643 = vmatpush2.msra.mxu0 0.0
    %1644 = vmatprep.subr.mxu0 0.0
    %1645 = vmatpush2.msra.mxu0 0.0
    %1646 = vmatprep.subr.mxu0 0.0
    %1647 = vmatpush2.msra.mxu0 0.0
    %1648 = vmatprep.subr.mxu0 0.0
    %1649 = vmatpush2.msra.mxu0 0.0
    %1650 = vmatprep.subr.mxu0 0.0
    %1651 = vmatpush2.msra.mxu0 0.0
    %1652 = vmatprep.subr.mxu0 0.0
    %1653 = vmatpush2.msra.mxu0 0.0
    %1654 = vmatprep.subr.mxu0 0.0
    %1655 = vmatpush2.msra.mxu0 0.0
    %1656 = vmatprep.mubr.f32.mxu0 0.0
    %v1657 = vand.u32 %v1013, 4294901760
    %1658 = vmatmul.mubr.f32.gmra.mxu0 %v1657
    %v1659 = vpop.f32.mrf.mxu0
    %v1660 = vadd.f32 %v1519, %v1659
    %v1661 = vpop.f32.mrf.mxu0
    %v1662 = vadd.f32 %v1521, %v1661
    %1663 = vmatprep.mubr.f32.mxu0 0.0
    %v1664 = vand.u32 %v1016, 4294901760
    %1665 = vmatmul.mubr.f32.gmra.mxu0 %v1664
    %v1666 = vpop.f32.mrf.mxu0
    %v1667 = vadd.f32 %v1528, %v1666
    %v1668 = vpop.f32.mrf.mxu0
    %v1669 = vadd.f32 %v1530, %v1668
    %1670 = vmatprep.mubr.f32.mxu0 0.0
    %v1671 = vand.u32 %v1019, 4294901760
    %1672 = vmatmul.mubr.f32.gmra.mxu0 %v1671
    %v1673 = vpop.f32.mrf.mxu0
    %v1674 = vadd.f32 %v1537, %v1673
    %v1675 = vpop.f32.mrf.mxu0
    %v1676 = vadd.f32 %v1539, %v1675
    %1677 = vmatprep.mubr.f32.mxu0 0.0
    %v1678 = vand.u32 %v1022, 4294901760
    %1679 = vmatmul.mubr.f32.gmra.mxu0 %v1678
    %v1680 = vpop.f32.mrf.mxu0
    %v1681 = vadd.f32 %v1546, %v1680
    %v1682 = vpop.f32.mrf.mxu0
    %v1683 = vadd.f32 %v1548, %v1682
    %1684 = vdwg.mxu0
    %1685 = vmatprep.subr.mxu0 0.0
    %1686 = vmatpush1.msra.mxu0 0.0
    %1687 = vmatprep.subr.mxu0 0.0
    %1688 = vmatpush1.msra.mxu0 0.0
    %1689 = vmatprep.subr.mxu0 0.0
    %1690 = vmatpush1.msra.mxu0 0.0
    %1691 = vmatprep.subr.mxu0 0.0
    %1692 = vmatpush1.msra.mxu0 0.0
    %1693 = vmatprep.subr.mxu0 0.0
    %1694 = vmatpush1.msra.mxu0 0.0
    %1695 = vmatprep.subr.mxu0 0.0
    %1696 = vmatpush1.msra.mxu0 0.0
    %1697 = vmatprep.subr.mxu0 0.0
    %1698 = vmatpush1.msra.mxu0 0.0
    %1699 = vmatprep.subr.mxu0 0.0
    %1700 = vmatpush1.msra.mxu0 0.0
    %1701 = vmatprep.subr.mxu0 0.0
    %1702 = vmatpush1.msra.mxu0 0.0
    %v1703 = vand.u32 %v222, 4294901760
    %1704 = vmatprep.subr.mxu0 %v1703
    %v1705 = vand.u32 %v221, 4294901760
    %1706 = vmatpush1.msra.mxu0 %v1705
    %v1707 = vand.u32 %v220, 4294901760
    %1708 = vmatprep.subr.mxu0 %v1707
    %v1709 = vand.u32 %v219, 4294901760
    %1710 = vmatpush1.msra.mxu0 %v1709
    %v1711 = vand.u32 %v218, 4294901760
    %1712 = vmatprep.subr.mxu0 %v1711
    %v1713 = vand.u32 %v217, 4294901760
    %1714 = vmatpush1.msra.mxu0 %v1713
    %v1715 = vand.u32 %v216, 4294901760
    %1716 = vmatprep.subr.mxu0 %v1715
    %v1717 = vand.u32 %v215, 4294901760
    %1718 = vmatpush1.msra.mxu0 %v1717
    %v1719 = vand.u32 %v214, 4294901760
    %1720 = vmatprep.subr.mxu0 %v1719
    %v1721 = vand.u32 %v213, 4294901760
    %1722 = vmatpush1.msra.mxu0 %v1721
    %v1723 = vand.u32 %v212, 4294901760
    %1724 = vmatprep.subr.mxu0 %v1723
    %v1725 = vand.u32 %v211, 4294901760
    %1726 = vmatpush1.msra.mxu0 %v1725
    %v1727 = vand.u32 %v210, 4294901760
    %1728 = vmatprep.subr.mxu0 %v1727
    %v1729 = vand.u32 %v209, 4294901760
    %1730 = vmatpush1.msra.mxu0 %v1729
    %1731 = vmatprep.subr.mxu0 0.0
    %1732 = vmatpush2.msra.mxu0 0.0
    %1733 = vmatprep.subr.mxu0 0.0
    %1734 = vmatpush2.msra.mxu0 0.0
    %1735 = vmatprep.subr.mxu0 0.0
    %1736 = vmatpush2.msra.mxu0 0.0
    %1737 = vmatprep.subr.mxu0 0.0
    %1738 = vmatpush2.msra.mxu0 0.0
    %1739 = vmatprep.subr.mxu0 0.0
    %1740 = vmatpush2.msra.mxu0 0.0
    %1741 = vmatprep.subr.mxu0 0.0
    %1742 = vmatpush2.msra.mxu0 0.0
    %1743 = vmatprep.subr.mxu0 0.0
    %1744 = vmatpush2.msra.mxu0 0.0
    %1745 = vmatprep.subr.mxu0 0.0
    %1746 = vmatpush2.msra.mxu0 0.0
    %1747 = vmatprep.subr.mxu0 0.0
    %1748 = vmatpush2.msra.mxu0 0.0
    %1749 = vmatprep.subr.mxu0 0.0
    %1750 = vmatpush2.msra.mxu0 0.0
    %1751 = vmatprep.subr.mxu0 0.0
    %1752 = vmatpush2.msra.mxu0 0.0
    %1753 = vmatprep.subr.mxu0 0.0
    %1754 = vmatpush2.msra.mxu0 0.0
    %1755 = vmatprep.subr.mxu0 0.0
    %1756 = vmatpush2.msra.mxu0 0.0
    %1757 = vmatprep.subr.mxu0 0.0
    %1758 = vmatpush2.msra.mxu0 0.0
    %1759 = vmatprep.subr.mxu0 0.0
    %1760 = vmatpush2.msra.mxu0 0.0
    %1761 = vmatprep.subr.mxu0 0.0
    %1762 = vmatpush2.msra.mxu0 0.0
    %1763 = vmatprep.mubr.f32.mxu0 0.0
    %v1764 = vand.u32 %v1013, 4294901760
    %1765 = vmatmul.mubr.f32.gmra.mxu0 %v1764
    %v1766 = vpop.f32.mrf.mxu0
    %v1767 = vadd.f32 %v1660, %v1766
    %v1768 = vpop.f32.mrf.mxu0
    %v1769 = vadd.f32 %v1662, %v1768
    %1770 = vmatprep.mubr.f32.mxu0 0.0
    %v1771 = vand.u32 %v1016, 4294901760
    %1772 = vmatmul.mubr.f32.gmra.mxu0 %v1771
    %v1773 = vpop.f32.mrf.mxu0
    %v1774 = vadd.f32 %v1667, %v1773
    %v1775 = vpop.f32.mrf.mxu0
    %v1776 = vadd.f32 %v1669, %v1775
    %1777 = vmatprep.mubr.f32.mxu0 0.0
    %v1778 = vand.u32 %v1019, 4294901760
    %1779 = vmatmul.mubr.f32.gmra.mxu0 %v1778
    %v1780 = vpop.f32.mrf.mxu0
    %v1781 = vadd.f32 %v1674, %v1780
    %v1782 = vpop.f32.mrf.mxu0
    %v1783 = vadd.f32 %v1676, %v1782
    %1784 = vmatprep.mubr.f32.mxu0 0.0
    %v1785 = vand.u32 %v1022, 4294901760
    %1786 = vmatmul.mubr.f32.gmra.mxu0 %v1785
    %v1787 = vpop.f32.mrf.mxu0
    %v1788 = vadd.f32 %v1681, %v1787
    %v1789 = vpop.f32.mrf.mxu0
    %v1790 = vadd.f32 %v1683, %v1789
    %1791 = vdwg.mxu0
    %v1792 = vmul.f32 %v983, %v1767
    %v1793 = vmul.f32 %v985, %v1769
    %v1794 = vmul.f32 %v990, %v1774
    %v1795 = vmul.f32 %v992, %v1776
    %v1796 = vmul.f32 %v997, %v1781
    %v1797 = vmul.f32 %v999, %v1783
    %v1798 = vmul.f32 %v1004, %v1788
    %v1799 = vmul.f32 %v1006, %v1790
    %v1800 = vadd.f32 %v1792, %v1794
    %v1801 = vadd.f32 %v1800, %v1796
    %v1802 = vadd.f32 %v1801, %v1798
    %v1803 = vrot.slane %v1802, 4
    %v1804 = vadd.f32 %v1802, %v1803
    %v1805 = vrot.slane %v1804, 2
    %v1806 = vadd.f32 %v1804, %v1805
    %v1807 = vrot.slane %v1806, 1
    %v1808 = vadd.f32 %v1806, %v1807
    %v1809 = vadd.f32 %v1793, %v1795
    %v1810 = vadd.f32 %v1809, %v1797
    %v1811 = vadd.f32 %v1810, %v1799
    %v1812 = vrot.slane %v1811, 4
    %v1813 = vadd.f32 %v1811, %v1812
    %v1814 = vrot.slane %v1813, 2
    %v1815 = vadd.f32 %v1813, %v1814
    %v1816 = vrot.slane %v1815, 1
    %v1817 = vadd.f32 %v1815, %v1816
    %v1820 = vcombine.low %v1808, %v1817
    %v1822 = vunpack.c.l.s4 1966171168
    %v1823 = vunpack.c.0.s8 %v1822
    %v1824 = vlaneseq
    %v1825 = vshrl.u32 %v1824, 7
    %v1826 = vsub.s32 %v1823, %v1825
    %v1827 = vrot.slane %v1820, %v1826
    %v1829 = vunpack.c.l.s4 1966171168
    %v1830 = vunpack.c.0.s8 %v1829
    %v1831 = vlaneseq
    %v1832 = vshrl.u32 %v1831, 7
    %v1833 = vsub.s32 %v1830, %v1832
    %v1834 = vrot.slane %v1827, %v1833
    %v1836 = vlaneseq
    %vm1837 = vcmp.ge.s32.totalorder %v1836, 0
    %vm1838 = vcmp.lt.s32.totalorder %v1836, 256
    %vm1839 = vmand %vm1837, %vm1838
    %1840 = vst.msk [vmem:[#allocation8] sm:$0x3] %vm1839, %v1834
    // Predicated region
    $region26: #{tpu_custom_call.1} parent=1 // pred_check
      _
    $region27: #{tpu_custom_call.1} parent=1 // pred_check_branch
      %1842 = sbr.rel (0) target = $region29
    $region28: #{tpu_custom_call.1} parent=1 // pred_region
      %s1844 = ssub.s32 32, 32
      %1845 = vsyncadd [#allocation4], %s1844
      %s1847 = sshll.u32 [#allocation8], 4
      %s1848 = int_to_ptr.vmem [resolvable:$true] %s1847
      %1850 = dma.vmem_to_hbm [thread:$0]  %s1848, 32, %s3, [#allocation4]
    $region29: #{tpu_custom_call.1} parent=1 // pred_fallthru
      _
    // Predicated region
    $region30: #{tpu_custom_call.1} parent=1 // pred_check
      _
    $region31: #{tpu_custom_call.1} parent=1 // pred_check_branch
      %1852 = sbr.rel (0) target = $region33
    $region32: #{tpu_custom_call.1} parent=1 // pred_region
      %1853 = dma.done [#allocation4], 32
    $region33: #{tpu_custom_call.1} parent=1 // pred_fallthru
      _
    %1854 = vsyncpa [#allocation3], 1
    %1855 = vsyncpa [#allocation6], 1
    %1856 = vsyncpa [#allocation4], 1

</llo_original>
